<compile_context>
chip_gen: v7x
topology: tpu7x:2x2x1
jax: 0.10.0
libtpu: 0.0.40
codegen_flags: <defaults>
</compile_context>

<pallas_src>
import functools

import jax
import jax.numpy as jnp
import numpy as np
from jax.experimental import pallas as pl
from jax.experimental.pallas import tpu as pltpu

# ---------------- config (small synthetic BERT) ----------------
VOCAB = 128
HIDDEN = 128
N_LAYERS = 2
N_HEADS = 4
HEAD_DIM = HIDDEN // N_HEADS
INTERMEDIATE = 256
MAX_POS = 32
FEATURE_LEN = 32
LN_EPS = 1e-12


def _gelu(x):
    # TODO(synk): HF BERT 'gelu' is erf-based; tanh approximation used here (diff < 1e-3).
    return jax.nn.gelu(x, approximate=True)


def _ln_f32(x, g, b, eps):
    mu = jnp.mean(x, axis=-1, keepdims=True)
    var = jnp.mean(jnp.square(x - mu), axis=-1, keepdims=True)
    return (x - mu) * jax.lax.rsqrt(var + eps) * g + b


# ---------------- fused whole-encoder Pallas kernel ----------------
def _bert_encoder_kernel(
    x_ref, embg_ref, embb_ref, bias_ref,
    wqkv_ref, bqkv_ref, wo_ref, bo_ref, ln1g_ref, ln1b_ref,
    w1_ref, b1_ref, w2_ref, b2_ref, ln2g_ref, ln2b_ref,
    o_ref, x_scr,
    *, n_heads, head_dim, eps, scale,
):
    """One encoder layer per grid step; x stays resident in VMEM across layers."""
    layer = pl.program_id(1)
    h = n_heads * head_dim
    tokens = x_ref.shape[0]

    # ---- layer 0: load embeddings + fused embedding LayerNorm into the resident buffer ----
    @pl.when(layer == 0)
    def _():
        xe = x_ref[...].astype(jnp.float32)
        x_scr[...] = _ln_f32(xe, embg_ref[...].astype(jnp.float32),
                             embb_ref[...].astype(jnp.float32), eps)

    x = x_scr[...]                                               # (T, H) f32, VMEM-resident

    # ---- fused QKV projection: one (H, 3H) matmul, bf16 operands, f32 accumulate ----
    qkv = jnp.dot(x.astype(jnp.bfloat16), wqkv_ref[0],
                  preferred_element_type=jnp.float32)
    qkv = qkv + bqkv_ref[0].astype(jnp.float32)                  # (T, 3H)

    # 1/sqrt(D) folded into q's bf16 cast (no per-head score scale).
    q_all = (qkv[:, :h] * scale).astype(jnp.bfloat16)            # (T, H)
    k_all = qkv[:, h:2 * h].astype(jnp.bfloat16)
    v_all = qkv[:, 2 * h:3 * h].astype(jnp.bfloat16)

    # ---- per-head scores, stacked along sublanes -> one (n_heads*T, T) buffer ----
    s_heads = []
    for hd in range(n_heads):
        lo, hi = hd * head_dim, (hd + 1) * head_dim
        s_heads.append(jax.lax.dot_general(                       # q_h @ k_h^T, no transpose
            q_all[:, lo:hi], k_all[:, lo:hi],
            (((1,), (1,)), ((), ())), preferred_element_type=jnp.float32))
    s = jnp.concatenate(s_heads, axis=0)                          # (n_heads*T, T)

    # block-diagonal batch mask (0 / -1e30 additive bias): tokens of different batch
    # rows packed into the same block never attend to each other.
    s = s + bias_ref[...]

    # ---- ONE softmax pass over all heads / batch rows ----
    s = s - jnp.max(s, axis=-1, keepdims=True)
    e = jnp.exp(s)
    p = (e * pl.reciprocal(jnp.sum(e, axis=-1, keepdims=True), approx=False)
         ).astype(jnp.bfloat16)                                   # (n_heads*T, T)

    # ---- PV + out-proj: slice w_o along K per head, accumulate in f32 (no ctx concat) ----
    wo = wo_ref[0]                                                # (H, H) bf16
    attn = bo_ref[0].astype(jnp.float32)                          # (1, H), broadcasts
    for hd in range(n_heads):
        lo, hi = hd * head_dim, (hd + 1) * head_dim
        ctx = jnp.dot(p[hd * tokens:(hd + 1) * tokens, :], v_all[:, lo:hi],
                      preferred_element_type=jnp.float32)         # (T, D)
        attn = attn + jnp.dot(ctx.astype(jnp.bfloat16), wo[lo:hi, :],
                              preferred_element_type=jnp.float32) # (T, H), lane-dense N

    x1 = _ln_f32(x + attn, ln1g_ref[0].astype(jnp.float32),
                 ln1b_ref[0].astype(jnp.float32), eps)

    # ---- FFN (GELU) + residual + LN2 ----
    hid = jnp.dot(x1.astype(jnp.bfloat16), w1_ref[0],
                  preferred_element_type=jnp.float32) + b1_ref[0].astype(jnp.float32)
    hid = _gelu(hid)
    ffn = jnp.dot(hid.astype(jnp.bfloat16), w2_ref[0],
                  preferred_element_type=jnp.float32) + b2_ref[0].astype(jnp.float32)
    x2 = _ln_f32(x1 + ffn, ln2g_ref[0].astype(jnp.float32),
                 ln2b_ref[0].astype(jnp.float32), eps)

    x_scr[...] = x2                                               # carry to next layer

    @pl.when(layer == pl.num_programs(1) - 1)
    def _():
        o_ref[...] = x2.astype(o_ref.dtype)                       # write HBM output once


def pallas_bert_encoder(x, params, *, batch, seq):
    """Embedding-LN + all encoder layers in a single pallas_call."""
    H, I, L = HIDDEN, INTERMEDIATE, N_LAYERS
    lp = params["layers"]

    # Pack as many batch elements per block as fit in ~128 token rows (wider MXU M).
    batch_tile = max(1, min(batch, max(1, 128 // seq)))
    while batch % batch_tile:
        batch_tile -= 1
    tokens = batch_tile * seq
    num_tiles = batch // batch_tile

    # Block-diagonal additive attention mask, tiled over heads (tiny constant input).
    tok_batch = np.arange(tokens) // seq
    same = tok_batch[:, None] == tok_batch[None, :]
    attn_bias = jnp.asarray(
        np.tile(np.where(same, 0.0, -1e30).astype(np.float32), (N_HEADS, 1)))

    kernel = functools.partial(
        _bert_encoder_kernel,
        n_heads=N_HEADS, head_dim=HEAD_DIM, eps=LN_EPS,
        scale=1.0 / float(np.sqrt(HEAD_DIM)),
    )

    row = lambda i, l: (i, 0)        # per batch-tile activation slab (constant over l)
    glb = lambda i, l: (0, 0)        # model-level constants: fetched once
    lyr = lambda i, l: (l, 0, 0)     # layer-stacked weights: one layer per grid step

    T = tokens
    flops = num_tiles * L * (2 * T * H * 3 * H + 4 * T * T * H + 2 * T * H * H
                             + 4 * T * H * I)
    transcendentals = num_tiles * L * (N_HEADS * T * T + T * I)
    bytes_accessed = (num_tiles * L * 2 * (H * 3 * H + H * H + 2 * H * I)
                      + 8 * batch * seq * H)

    return pl.pallas_call(
        kernel,
        out_shape=jax.ShapeDtypeStruct((batch * seq, H), x.dtype),
        grid=(num_tiles, N_LAYERS),
        in_specs=[
            pl.BlockSpec((tokens, H), row),                    # x (embeddings, pre-LN)
            pl.BlockSpec((1, H), glb),                         # emb_ln_g
            pl.BlockSpec((1, H), glb),                         # emb_ln_b
            pl.BlockSpec((N_HEADS * tokens, tokens), glb),     # attention batch-mask bias
            pl.BlockSpec((1, H, 3 * H), lyr),                  # w_qkv (bf16)
            pl.BlockSpec((1, 1, 3 * H), lyr),                  # b_qkv
            pl.BlockSpec((1, H, H), lyr),                      # w_o   (bf16)
            pl.BlockSpec((1, 1, H), lyr),                      # b_o
            pl.BlockSpec((1, 1, H), lyr),                      # ln1_g
            pl.BlockSpec((1, 1, H), lyr),                      # ln1_b
            pl.BlockSpec((1, H, I), lyr),                      # w_1   (bf16)
            pl.BlockSpec((1, 1, I), lyr),                      # b_1
            pl.BlockSpec((1, I, H), lyr),                      # w_2   (bf16)
            pl.BlockSpec((1, 1, H), lyr),                      # b_2
            pl.BlockSpec((1, 1, H), lyr),                      # ln2_g
            pl.BlockSpec((1, 1, H), lyr),                      # ln2_b
        ],
        out_specs=pl.BlockSpec((tokens, H), row),
        scratch_shapes=[pltpu.VMEM((tokens, H), jnp.float32)], # layer-resident activation
        compiler_params=pltpu.CompilerParams(
            dimension_semantics=("parallel", "arbitrary")),
        cost_estimate=pl.CostEstimate(flops=int(flops),
                                      transcendentals=int(transcendentals),
                                      bytes_accessed=int(bytes_accessed)),
    )(
        x, params["emb_ln_g"], params["emb_ln_b"], attn_bias,
        lp["w_qkv"], lp["b_qkv"], lp["w_o"], lp["b_o"],
        lp["ln1_g"], lp["ln1_b"], lp["w_1"], lp["b_1"],
        lp["w_2"], lp["b_2"], lp["ln2_g"], lp["ln2_b"],
    )


# ---------------- pure-JAX f32 reference (for correctness check) ----------------
def ref_encoder(x, params, batch, seq):
    h = HIDDEN
    lp = params["layers"]
    x = _ln_f32(x, params["emb_ln_g"], params["emb_ln_b"], LN_EPS)
    for l in range(N_LAYERS):
        qkv = x @ lp["w_qkv"][l].astype(jnp.float32) + lp["b_qkv"][l]
        q, k, v = qkv[:, :h], qkv[:, h:2 * h], qkv[:, 2 * h:]

        def split(t):
            return t.reshape(batch, seq, N_HEADS, HEAD_DIM).transpose(0, 2, 1, 3)

        s = jnp.einsum("bhqd,bhkd->bhqk", split(q), split(k)) / np.sqrt(HEAD_DIM)
        p = jax.nn.softmax(s, axis=-1)
        ctx = jnp.einsum("bhqk,bhkd->bhqd", p, split(v))
        ctx = ctx.transpose(0, 2, 1, 3).reshape(batch * seq, h)

        attn = ctx @ lp["w_o"][l].astype(jnp.float32) + lp["b_o"][l]
        x = _ln_f32(x + attn, lp["ln1_g"][l], lp["ln1_b"][l], LN_EPS)
        hid = _gelu(x @ lp["w_1"][l].astype(jnp.float32) + lp["b_1"][l])
        ffn = hid @ lp["w_2"][l].astype(jnp.float32) + lp["b_2"][l]
        x = _ln_f32(x + ffn, lp["ln2_g"][l], lp["ln2_b"][l], LN_EPS)
    return x


# ---------------- parameters (per-layer weights stacked along a leading layer dim) ----------------
def init_params(key):
    std = 0.02
    ks = jax.random.split(key, 19)
    L, H, I = N_LAYERS, HIDDEN, INTERMEDIATE

    def norm(k, shape, dtype=jnp.float32):
        return (jax.random.normal(k, shape, jnp.float32) * std).astype(dtype)

    return {
        "word_emb": norm(ks[0], (VOCAB, H)),
        "pos_emb": norm(ks[1], (MAX_POS, H)),
        "type_emb": norm(ks[2], (2, H)),
        "emb_ln_g": 1.0 + norm(ks[3], (1, H)),
        "emb_ln_b": norm(ks[4], (1, H)),
        "fc_w": norm(ks[5], (H, FEATURE_LEN)),
        "fc_b": norm(ks[6], (FEATURE_LEN,)),
        "layers": {
            # fused wq|wk|wv along output dim; matmul weights stored bf16 (MXU native).
            "w_qkv": norm(ks[7], (L, H, 3 * H), jnp.bfloat16),
            "b_qkv": norm(ks[8], (L, 1, 3 * H)),
            "w_o": norm(ks[9], (L, H, H), jnp.bfloat16),
            "b_o": norm(ks[10], (L, 1, H)),
            "ln1_g": 1.0 + norm(ks[11], (L, 1, H)),
            "ln1_b": norm(ks[12], (L, 1, H)),
            "w_1": norm(ks[13], (L, H, I), jnp.bfloat16),
            "b_1": norm(ks[14], (L, 1, I)),
            "w_2": norm(ks[15], (L, I, H), jnp.bfloat16),
            "b_2": norm(ks[16], (L, 1, H)),
            "ln2_g": 1.0 + norm(ks[17], (L, 1, H)),
            "ln2_b": norm(ks[18], (L, 1, H)),
        },
    }


# ---------------- full forward ----------------
def bert_forward(params, ids, *, use_pallas=True):
    B, S = ids.shape
    H = HIDDEN

    # embeddings (gathers + sums stay in XLA; their LayerNorm is fused into the kernel)
    emb = (
        jnp.take(params["word_emb"], ids, axis=0)
        + params["pos_emb"][:S][None, :, :]
        + params["type_emb"][0][None, None, :]
    )
    x = emb.reshape(B * S, H)

    if use_pallas:
        x = pallas_bert_encoder(x, params, batch=B, seq=S)
    else:
        x = ref_encoder(x, params, B, S)

    cls = x.reshape(B, S, H)[:, 0, :]                 # [:, 0, :] -- CLS token
    # Final nn.Linear head stays in plain XLA: (2, 32) output is lane-sparse and a
    # pallas_call launch would cost more than the matmul.
    return cls @ params["fc_w"] + params["fc_b"]


if __name__ == "__main__":
    root = jax.random.PRNGKey(0)
    k_param, k_ids = jax.random.split(root)

    params = init_params(k_param)
    ids = jax.random.randint(k_ids, (2, 8), 0, VOCAB, dtype=jnp.int32)  # (batch=2, seq=8)

    out = jax.block_until_ready(bert_forward(params, ids, use_pallas=True))
    assert out.shape == (2, FEATURE_LEN) and out.dtype == jnp.float32

    ref = bert_forward(params, ids, use_pallas=False)
    # Kernel uses bf16 MXU operands (f32 accumulation) vs a pure-f32 reference.
    np.testing.assert_allclose(np.asarray(out), np.asarray(ref), rtol=2e-2, atol=2e-3)

    print("KERNEL_OK")
</pallas_src>

<mosaic_0001>
module attributes {stable_mosaic.version = 11 : i64} {
  func.func @_bert_encoder_kernel(%arg0: i32, %arg1: i32, %arg2: memref<16x128xf32, #tpu.memory_space<vmem>>, %arg3: memref<1x128xf32, #tpu.memory_space<vmem>>, %arg4: memref<1x128xf32, #tpu.memory_space<vmem>>, %arg5: memref<64x16xf32, #tpu.memory_space<vmem>>, %arg6: memref<1x128x384xbf16, #tpu.memory_space<vmem>>, %arg7: memref<1x1x384xf32, #tpu.memory_space<vmem>>, %arg8: memref<1x128x128xbf16, #tpu.memory_space<vmem>>, %arg9: memref<1x1x128xf32, #tpu.memory_space<vmem>>, %arg10: memref<1x1x128xf32, #tpu.memory_space<vmem>>, %arg11: memref<1x1x128xf32, #tpu.memory_space<vmem>>, %arg12: memref<1x128x256xbf16, #tpu.memory_space<vmem>>, %arg13: memref<1x1x256xf32, #tpu.memory_space<vmem>>, %arg14: memref<1x256x128xbf16, #tpu.memory_space<vmem>>, %arg15: memref<1x1x128xf32, #tpu.memory_space<vmem>>, %arg16: memref<1x1x128xf32, #tpu.memory_space<vmem>>, %arg17: memref<1x1x128xf32, #tpu.memory_space<vmem>>, %arg18: memref<16x128xf32, #tpu.memory_space<vmem>>, %arg19: memref<16x128xf32, #tpu.memory_space<vmem>>) attributes {dimension_semantics = [#tpu.dimension_semantics<parallel>, #tpu.dimension_semantics<arbitrary>], iteration_bounds = array<i64: 1, 2>, scalar_prefetch = 0 : i64, scratch_operands = 1 : i64, tpu.core_type = #tpu.core_type<tc>, window_params = [{transform_indices = @transform_0, window_bounds = array<i64: 16, 128>}, {pipeline_mode = #tpu.pipeline_mode<synchronous>, transform_indices = @transform_1, window_bounds = array<i64: 1, 128>}, {pipeline_mode = #tpu.pipeline_mode<synchronous>, transform_indices = @transform_2, window_bounds = array<i64: 1, 128>}, {pipeline_mode = #tpu.pipeline_mode<synchronous>, transform_indices = @transform_3, window_bounds = array<i64: 64, 16>}, {transform_indices = @transform_4, window_bounds = array<i64: 1, 128, 384>}, {transform_indices = @transform_5, window_bounds = array<i64: 1, 1, 384>}, {transform_indices = @transform_6, window_bounds = array<i64: 1, 128, 128>}, {transform_indices = @transform_7, window_bounds = array<i64: 1, 1, 128>}, {transform_indices = @transform_8, window_bounds = array<i64: 1, 1, 128>}, {transform_indices = @transform_9, window_bounds = array<i64: 1, 1, 128>}, {transform_indices = @transform_10, window_bounds = array<i64: 1, 128, 256>}, {transform_indices = @transform_11, window_bounds = array<i64: 1, 1, 256>}, {transform_indices = @transform_12, window_bounds = array<i64: 1, 256, 128>}, {transform_indices = @transform_13, window_bounds = array<i64: 1, 1, 128>}, {transform_indices = @transform_14, window_bounds = array<i64: 1, 1, 128>}, {transform_indices = @transform_15, window_bounds = array<i64: 1, 1, 128>}, {transform_indices = @transform_16, window_bounds = array<i64: 16, 128>}]} {
    %c0_i32 = arith.constant 0 : i32
    %0 = arith.cmpi eq, %arg1, %c0_i32 : i32
    %1 = arith.extui %0 : i1 to i32
    %c0_i32_0 = arith.constant 0 : i32
    %2 = arith.cmpi ne, %1, %c0_i32_0 : i32
    scf.if %2 {
      %c0_74 = arith.constant 0 : index
      %c0_75 = arith.constant 0 : index
      %166 = vector.load %arg2[%c0_74, %c0_75] : memref<16x128xf32, #tpu.memory_space<vmem>>, vector<16x128xf32>
      %c0_76 = arith.constant 0 : index
      %c0_77 = arith.constant 0 : index
      %167 = vector.load %arg3[%c0_76, %c0_77] : memref<1x128xf32, #tpu.memory_space<vmem>>, vector<1x128xf32>
      %c0_78 = arith.constant 0 : index
      %c0_79 = arith.constant 0 : index
      %168 = vector.load %arg4[%c0_78, %c0_79] : memref<1x128xf32, #tpu.memory_space<vmem>>, vector<1x128xf32>
      %cst_80 = arith.constant dense<0.000000e+00> : vector<16xf32>
      %169 = vector.multi_reduction <add>, %166, %cst_80 [1] : vector<16x128xf32> to vector<16xf32>
      %170 = vector.shape_cast %169 : vector<16xf32> to vector<16x1xf32>
      %cst_81 = arith.constant 1.280000e+02 : f32
      %171 = vector.broadcast %cst_81 : f32 to vector<16x1xf32>
      %172 = arith.divf %170, %171 : vector<16x1xf32>
      %173 = vector.broadcast %172 : vector<16x1xf32> to vector<16x128xf32>
      %174 = arith.subf %166, %173 : vector<16x128xf32>
      %175 = arith.mulf %174, %174 : vector<16x128xf32>
      %cst_82 = arith.constant dense<0.000000e+00> : vector<16xf32>
      %176 = vector.multi_reduction <add>, %175, %cst_82 [1] : vector<16x128xf32> to vector<16xf32>
      %177 = vector.shape_cast %176 : vector<16xf32> to vector<16x1xf32>
      %cst_83 = arith.constant 1.280000e+02 : f32
      %178 = vector.broadcast %cst_83 : f32 to vector<16x1xf32>
      %179 = arith.divf %177, %178 : vector<16x1xf32>
      %180 = vector.broadcast %172 : vector<16x1xf32> to vector<16x128xf32>
      %181 = arith.subf %166, %180 : vector<16x128xf32>
      %cst_84 = arith.constant 9.99999996E-13 : f32
      %182 = vector.broadcast %cst_84 : f32 to vector<16x1xf32>
      %183 = arith.addf %179, %182 : vector<16x1xf32>
      %184 = math.rsqrt %183 : vector<16x1xf32>
      %185 = vector.broadcast %184 : vector<16x1xf32> to vector<16x128xf32>
      %186 = arith.mulf %181, %185 : vector<16x128xf32>
      %187 = vector.broadcast %167 : vector<1x128xf32> to vector<16x128xf32>
      %188 = arith.mulf %186, %187 : vector<16x128xf32>
      %189 = vector.broadcast %168 : vector<1x128xf32> to vector<16x128xf32>
      %190 = arith.addf %188, %189 : vector<16x128xf32>
      %c0_85 = arith.constant 0 : index
      %c0_86 = arith.constant 0 : index
      %191 = vector.load %arg19[%c0_85, %c0_86] : memref<16x128xf32, #tpu.memory_space<vmem>>, vector<16x128xf32>
      tpu.vector_store %arg19[%c0_85, %c0_86], %190 {strides = array<i32>} : memref<16x128xf32, #tpu.memory_space<vmem>>, vector<16x128xf32>,
    } else {
    }
    %c0 = arith.constant 0 : index
    %c0_1 = arith.constant 0 : index
    %3 = vector.load %arg19[%c0, %c0_1] : memref<16x128xf32, #tpu.memory_space<vmem>>, vector<16x128xf32>
    %4 = arith.truncf %3 : vector<16x128xf32> to vector<16x128xbf16>
    %c0_2 = arith.constant 0 : index
    %c0_3 = arith.constant 0 : index
    %c0_4 = arith.constant 0 : index
    %5 = vector.load %arg6[%c0_2, %c0_3, %c0_4] : memref<1x128x384xbf16, #tpu.memory_space<vmem>>, vector<1x128x384xbf16>
    %6 = vector.shape_cast %5 : vector<1x128x384xbf16> to vector<128x384xbf16>
    %cst = arith.constant dense<0.000000e+00> : vector<16x384xf32>
    %7 = tpu.matmul %4, %6, %cst {dimension_numbers = #tpu.dot_dimension_numbers<[1], [0], [0], [1], [0, 0, 1, 1], [], []>} : vector<16x128xbf16>, vector<128x384xbf16>, vector<16x384xf32> -> vector<16x384xf32>
    %c0_5 = arith.constant 0 : index
    %c0_6 = arith.constant 0 : index
    %c0_7 = arith.constant 0 : index
    %8 = vector.load %arg7[%c0_5, %c0_6, %c0_7] : memref<1x1x384xf32, #tpu.memory_space<vmem>>, vector<1x1x384xf32>
    %9 = vector.shape_cast %8 : vector<1x1x384xf32> to vector<1x384xf32>
    %10 = vector.broadcast %9 : vector<1x384xf32> to vector<16x384xf32>
    %11 = arith.addf %7, %10 : vector<16x384xf32>
    %12 = vector.extract_strided_slice %11 {offsets = [0, 0], sizes = [16, 128], strides = [1, 1]} : vector<16x384xf32> to vector<16x128xf32>
    %cst_8 = arith.constant 0.176776692 : f32
    %13 = vector.broadcast %cst_8 : f32 to vector<16x128xf32>
    %14 = arith.mulf %12, %13 : vector<16x128xf32>
    %15 = arith.truncf %14 : vector<16x128xf32> to vector<16x128xbf16>
    %16 = vector.extract_strided_slice %11 {offsets = [0, 128], sizes = [16, 128], strides = [1, 1]} : vector<16x384xf32> to vector<16x128xf32>
    %17 = arith.truncf %16 : vector<16x128xf32> to vector<16x128xbf16>
    %18 = vector.extract_strided_slice %11 {offsets = [0, 256], sizes = [16, 128], strides = [1, 1]} : vector<16x384xf32> to vector<16x128xf32>
    %19 = arith.truncf %18 : vector<16x128xf32> to vector<16x128xbf16>
    %20 = vector.extract_strided_slice %15 {offsets = [0, 0], sizes = [16, 32], strides = [1, 1]} : vector<16x128xbf16> to vector<16x32xbf16>
    %21 = vector.extract_strided_slice %17 {offsets = [0, 0], sizes = [16, 32], strides = [1, 1]} : vector<16x128xbf16> to vector<16x32xbf16>
    %cst_9 = arith.constant dense<0.000000e+00> : vector<16x16xf32>
    %22 = tpu.matmul %20, %21, %cst_9 {dimension_numbers = #tpu.dot_dimension_numbers<[1], [1], [0], [0], [0, 0, 1, 0], [], []>} : vector<16x32xbf16>, vector<16x32xbf16>, vector<16x16xf32> -> vector<16x16xf32>
    %23 = vector.extract_strided_slice %15 {offsets = [0, 32], sizes = [16, 32], strides = [1, 1]} : vector<16x128xbf16> to vector<16x32xbf16>
    %24 = vector.extract_strided_slice %17 {offsets = [0, 32], sizes = [16, 32], strides = [1, 1]} : vector<16x128xbf16> to vector<16x32xbf16>
    %cst_10 = arith.constant dense<0.000000e+00> : vector<16x16xf32>
    %25 = tpu.matmul %23, %24, %cst_10 {dimension_numbers = #tpu.dot_dimension_numbers<[1], [1], [0], [0], [0, 0, 1, 0], [], []>} : vector<16x32xbf16>, vector<16x32xbf16>, vector<16x16xf32> -> vector<16x16xf32>
    %26 = vector.extract_strided_slice %15 {offsets = [0, 64], sizes = [16, 32], strides = [1, 1]} : vector<16x128xbf16> to vector<16x32xbf16>
    %27 = vector.extract_strided_slice %17 {offsets = [0, 64], sizes = [16, 32], strides = [1, 1]} : vector<16x128xbf16> to vector<16x32xbf16>
    %cst_11 = arith.constant dense<0.000000e+00> : vector<16x16xf32>
    %28 = tpu.matmul %26, %27, %cst_11 {dimension_numbers = #tpu.dot_dimension_numbers<[1], [1], [0], [0], [0, 0, 1, 0], [], []>} : vector<16x32xbf16>, vector<16x32xbf16>, vector<16x16xf32> -> vector<16x16xf32>
    %29 = vector.extract_strided_slice %15 {offsets = [0, 96], sizes = [16, 32], strides = [1, 1]} : vector<16x128xbf16> to vector<16x32xbf16>
    %30 = vector.extract_strided_slice %17 {offsets = [0, 96], sizes = [16, 32], strides = [1, 1]} : vector<16x128xbf16> to vector<16x32xbf16>
    %cst_12 = arith.constant dense<0.000000e+00> : vector<16x16xf32>
    %31 = tpu.matmul %29, %30, %cst_12 {dimension_numbers = #tpu.dot_dimension_numbers<[1], [1], [0], [0], [0, 0, 1, 0], [], []>} : vector<16x32xbf16>, vector<16x32xbf16>, vector<16x16xf32> -> vector<16x16xf32>
    %32 = tpu.concatenate %22, %25, %28, %31 in 0 : vector<16x16xf32>, vector<16x16xf32>, vector<16x16xf32>, vector<16x16xf32> -> vector<64x16xf32>
    %c0_13 = arith.constant 0 : index
    %c0_14 = arith.constant 0 : index
    %33 = vector.load %arg5[%c0_13, %c0_14] : memref<64x16xf32, #tpu.memory_space<vmem>>, vector<64x16xf32>
    %34 = arith.addf %32, %33 : vector<64x16xf32>
    %cst_15 = arith.constant dense<0xFF800000> : vector<64xf32>
    %35 = vector.multi_reduction <maximumf>, %34, %cst_15 [1] : vector<64x16xf32> to vector<64xf32>
    %36 = vector.shape_cast %35 : vector<64xf32> to vector<64x1xf32>
    %37 = vector.broadcast %36 : vector<64x1xf32> to vector<64x16xf32>
    %38 = arith.subf %34, %37 : vector<64x16xf32>
    %39 = math.exp %38 : vector<64x16xf32>
    %cst_16 = arith.constant dense<0.000000e+00> : vector<64xf32>
    %40 = vector.multi_reduction <add>, %39, %cst_16 [1] : vector<64x16xf32> to vector<64xf32>
    %41 = vector.shape_cast %40 : vector<64xf32> to vector<64x1xf32>
    %42 = tpu.reciprocal %41 : vector<64x1xf32> -> vector<64x1xf32>
    %43 = vector.broadcast %42 : vector<64x1xf32> to vector<64x16xf32>
    %44 = arith.mulf %39, %43 : vector<64x16xf32>
    %45 = arith.truncf %44 : vector<64x16xf32> to vector<64x16xbf16>
    %c0_17 = arith.constant 0 : index
    %c0_18 = arith.constant 0 : index
    %c0_19 = arith.constant 0 : index
    %46 = vector.load %arg8[%c0_17, %c0_18, %c0_19] : memref<1x128x128xbf16, #tpu.memory_space<vmem>>, vector<1x128x128xbf16>
    %47 = vector.shape_cast %46 : vector<1x128x128xbf16> to vector<128x128xbf16>
    %c0_20 = arith.constant 0 : index
    %c0_21 = arith.constant 0 : index
    %c0_22 = arith.constant 0 : index
    %48 = vector.load %arg9[%c0_20, %c0_21, %c0_22] : memref<1x1x128xf32, #tpu.memory_space<vmem>>, vector<1x1x128xf32>
    %49 = vector.shape_cast %48 : vector<1x1x128xf32> to vector<1x128xf32>
    %50 = vector.extract_strided_slice %45 {offsets = [0, 0], sizes = [16, 16], strides = [1, 1]} : vector<64x16xbf16> to vector<16x16xbf16>
    %51 = vector.extract_strided_slice %19 {offsets = [0, 0], sizes = [16, 32], strides = [1, 1]} : vector<16x128xbf16> to vector<16x32xbf16>
    %cst_23 = arith.constant dense<0.000000e+00> : vector<16x32xf32>
    %52 = tpu.matmul %50, %51, %cst_23 {dimension_numbers = #tpu.dot_dimension_numbers<[1], [0], [0], [1], [0, 0, 1, 1], [], []>} : vector<16x16xbf16>, vector<16x32xbf16>, vector<16x32xf32> -> vector<16x32xf32>
    %53 = arith.truncf %52 : vector<16x32xf32> to vector<16x32xbf16>
    %54 = vector.extract_strided_slice %47 {offsets = [0, 0], sizes = [32, 128], strides = [1, 1]} : vector<128x128xbf16> to vector<32x128xbf16>
    %cst_24 = arith.constant dense<0.000000e+00> : vector<16x128xf32>
    %55 = tpu.matmul %53, %54, %cst_24 {dimension_numbers = #tpu.dot_dimension_numbers<[1], [0], [0], [1], [0, 0, 1, 1], [], []>} : vector<16x32xbf16>, vector<32x128xbf16>, vector<16x128xf32> -> vector<16x128xf32>
    %56 = vector.broadcast %49 : vector<1x128xf32> to vector<16x128xf32>
    %57 = arith.addf %56, %55 : vector<16x128xf32>
    %58 = vector.extract_strided_slice %45 {offsets = [16, 0], sizes = [16, 16], strides = [1, 1]} : vector<64x16xbf16> to vector<16x16xbf16>
    %59 = vector.extract_strided_slice %19 {offsets = [0, 32], sizes = [16, 32], strides = [1, 1]} : vector<16x128xbf16> to vector<16x32xbf16>
    %cst_25 = arith.constant dense<0.000000e+00> : vector<16x32xf32>
    %60 = tpu.matmul %58, %59, %cst_25 {dimension_numbers = #tpu.dot_dimension_numbers<[1], [0], [0], [1], [0, 0, 1, 1], [], []>} : vector<16x16xbf16>, vector<16x32xbf16>, vector<16x32xf32> -> vector<16x32xf32>
    %61 = arith.truncf %60 : vector<16x32xf32> to vector<16x32xbf16>
    %62 = vector.extract_strided_slice %47 {offsets = [32, 0], sizes = [32, 128], strides = [1, 1]} : vector<128x128xbf16> to vector<32x128xbf16>
    %cst_26 = arith.constant dense<0.000000e+00> : vector<16x128xf32>
    %63 = tpu.matmul %61, %62, %cst_26 {dimension_numbers = #tpu.dot_dimension_numbers<[1], [0], [0], [1], [0, 0, 1, 1], [], []>} : vector<16x32xbf16>, vector<32x128xbf16>, vector<16x128xf32> -> vector<16x128xf32>
    %64 = arith.addf %57, %63 : vector<16x128xf32>
    %65 = vector.extract_strided_slice %45 {offsets = [32, 0], sizes = [16, 16], strides = [1, 1]} : vector<64x16xbf16> to vector<16x16xbf16>
    %66 = vector.extract_strided_slice %19 {offsets = [0, 64], sizes = [16, 32], strides = [1, 1]} : vector<16x128xbf16> to vector<16x32xbf16>
    %cst_27 = arith.constant dense<0.000000e+00> : vector<16x32xf32>
    %67 = tpu.matmul %65, %66, %cst_27 {dimension_numbers = #tpu.dot_dimension_numbers<[1], [0], [0], [1], [0, 0, 1, 1], [], []>} : vector<16x16xbf16>, vector<16x32xbf16>, vector<16x32xf32> -> vector<16x32xf32>
    %68 = arith.truncf %67 : vector<16x32xf32> to vector<16x32xbf16>
    %69 = vector.extract_strided_slice %47 {offsets = [64, 0], sizes = [32, 128], strides = [1, 1]} : vector<128x128xbf16> to vector<32x128xbf16>
    %cst_28 = arith.constant dense<0.000000e+00> : vector<16x128xf32>
    %70 = tpu.matmul %68, %69, %cst_28 {dimension_numbers = #tpu.dot_dimension_numbers<[1], [0], [0], [1], [0, 0, 1, 1], [], []>} : vector<16x32xbf16>, vector<32x128xbf16>, vector<16x128xf32> -> vector<16x128xf32>
    %71 = arith.addf %64, %70 : vector<16x128xf32>
    %72 = vector.extract_strided_slice %45 {offsets = [48, 0], sizes = [16, 16], strides = [1, 1]} : vector<64x16xbf16> to vector<16x16xbf16>
    %73 = vector.extract_strided_slice %19 {offsets = [0, 96], sizes = [16, 32], strides = [1, 1]} : vector<16x128xbf16> to vector<16x32xbf16>
    %cst_29 = arith.constant dense<0.000000e+00> : vector<16x32xf32>
    %74 = tpu.matmul %72, %73, %cst_29 {dimension_numbers = #tpu.dot_dimension_numbers<[1], [0], [0], [1], [0, 0, 1, 1], [], []>} : vector<16x16xbf16>, vector<16x32xbf16>, vector<16x32xf32> -> vector<16x32xf32>
    %75 = arith.truncf %74 : vector<16x32xf32> to vector<16x32xbf16>
    %76 = vector.extract_strided_slice %47 {offsets = [96, 0], sizes = [32, 128], strides = [1, 1]} : vector<128x128xbf16> to vector<32x128xbf16>
    %cst_30 = arith.constant dense<0.000000e+00> : vector<16x128xf32>
    %77 = tpu.matmul %75, %76, %cst_30 {dimension_numbers = #tpu.dot_dimension_numbers<[1], [0], [0], [1], [0, 0, 1, 1], [], []>} : vector<16x32xbf16>, vector<32x128xbf16>, vector<16x128xf32> -> vector<16x128xf32>
    %78 = arith.addf %71, %77 : vector<16x128xf32>
    %79 = arith.addf %3, %78 : vector<16x128xf32>
    %c0_31 = arith.constant 0 : index
    %c0_32 = arith.constant 0 : index
    %c0_33 = arith.constant 0 : index
    %80 = vector.load %arg10[%c0_31, %c0_32, %c0_33] : memref<1x1x128xf32, #tpu.memory_space<vmem>>, vector<1x1x128xf32>
    %81 = vector.shape_cast %80 : vector<1x1x128xf32> to vector<1x128xf32>
    %c0_34 = arith.constant 0 : index
    %c0_35 = arith.constant 0 : index
    %c0_36 = arith.constant 0 : index
    %82 = vector.load %arg11[%c0_34, %c0_35, %c0_36] : memref<1x1x128xf32, #tpu.memory_space<vmem>>, vector<1x1x128xf32>
    %83 = vector.shape_cast %82 : vector<1x1x128xf32> to vector<1x128xf32>
    %cst_37 = arith.constant dense<0.000000e+00> : vector<16xf32>
    %84 = vector.multi_reduction <add>, %79, %cst_37 [1] : vector<16x128xf32> to vector<16xf32>
    %85 = vector.shape_cast %84 : vector<16xf32> to vector<16x1xf32>
    %cst_38 = arith.constant 1.280000e+02 : f32
    %86 = vector.broadcast %cst_38 : f32 to vector<16x1xf32>
    %87 = arith.divf %85, %86 : vector<16x1xf32>
    %88 = vector.broadcast %87 : vector<16x1xf32> to vector<16x128xf32>
    %89 = arith.subf %79, %88 : vector<16x128xf32>
    %90 = arith.mulf %89, %89 : vector<16x128xf32>
    %cst_39 = arith.constant dense<0.000000e+00> : vector<16xf32>
    %91 = vector.multi_reduction <add>, %90, %cst_39 [1] : vector<16x128xf32> to vector<16xf32>
    %92 = vector.shape_cast %91 : vector<16xf32> to vector<16x1xf32>
    %cst_40 = arith.constant 1.280000e+02 : f32
    %93 = vector.broadcast %cst_40 : f32 to vector<16x1xf32>
    %94 = arith.divf %92, %93 : vector<16x1xf32>
    %95 = vector.broadcast %87 : vector<16x1xf32> to vector<16x128xf32>
    %96 = arith.subf %79, %95 : vector<16x128xf32>
    %cst_41 = arith.constant 9.99999996E-13 : f32
    %97 = vector.broadcast %cst_41 : f32 to vector<16x1xf32>
    %98 = arith.addf %94, %97 : vector<16x1xf32>
    %99 = math.rsqrt %98 : vector<16x1xf32>
    %100 = vector.broadcast %99 : vector<16x1xf32> to vector<16x128xf32>
    %101 = arith.mulf %96, %100 : vector<16x128xf32>
    %102 = vector.broadcast %81 : vector<1x128xf32> to vector<16x128xf32>
    %103 = arith.mulf %101, %102 : vector<16x128xf32>
    %104 = vector.broadcast %83 : vector<1x128xf32> to vector<16x128xf32>
    %105 = arith.addf %103, %104 : vector<16x128xf32>
    %106 = arith.truncf %105 : vector<16x128xf32> to vector<16x128xbf16>
    %c0_42 = arith.constant 0 : index
    %c0_43 = arith.constant 0 : index
    %c0_44 = arith.constant 0 : index
    %107 = vector.load %arg12[%c0_42, %c0_43, %c0_44] : memref<1x128x256xbf16, #tpu.memory_space<vmem>>, vector<1x128x256xbf16>
    %108 = vector.shape_cast %107 : vector<1x128x256xbf16> to vector<128x256xbf16>
    %cst_45 = arith.constant dense<0.000000e+00> : vector<16x256xf32>
    %109 = tpu.matmul %106, %108, %cst_45 {dimension_numbers = #tpu.dot_dimension_numbers<[1], [0], [0], [1], [0, 0, 1, 1], [], []>} : vector<16x128xbf16>, vector<128x256xbf16>, vector<16x256xf32> -> vector<16x256xf32>
    %c0_46 = arith.constant 0 : index
    %c0_47 = arith.constant 0 : index
    %c0_48 = arith.constant 0 : index
    %110 = vector.load %arg13[%c0_46, %c0_47, %c0_48] : memref<1x1x256xf32, #tpu.memory_space<vmem>>, vector<1x1x256xf32>
    %111 = vector.shape_cast %110 : vector<1x1x256xf32> to vector<1x256xf32>
    %112 = vector.broadcast %111 : vector<1x256xf32> to vector<16x256xf32>
    %113 = arith.addf %109, %112 : vector<16x256xf32>
    %114 = arith.mulf %113, %113 : vector<16x256xf32>
    %115 = arith.mulf %113, %114 : vector<16x256xf32>
    %cst_49 = arith.constant 4.471500e-02 : f32
    %116 = vector.broadcast %cst_49 : f32 to vector<16x256xf32>
    %117 = arith.mulf %116, %115 : vector<16x256xf32>
    %118 = arith.addf %113, %117 : vector<16x256xf32>
    %cst_50 = arith.constant 0.797884583 : f32
    %119 = vector.broadcast %cst_50 : f32 to vector<16x256xf32>
    %120 = arith.mulf %119, %118 : vector<16x256xf32>
    %121 = math.tanh %120 : vector<16x256xf32>
    %cst_51 = arith.constant 1.000000e+00 : f32
    %122 = vector.broadcast %cst_51 : f32 to vector<16x256xf32>
    %123 = arith.addf %122, %121 : vector<16x256xf32>
    %cst_52 = arith.constant 5.000000e-01 : f32
    %124 = vector.broadcast %cst_52 : f32 to vector<16x256xf32>
    %125 = arith.mulf %124, %123 : vector<16x256xf32>
    %126 = arith.mulf %113, %125 : vector<16x256xf32>
    %127 = arith.truncf %126 : vector<16x256xf32> to vector<16x256xbf16>
    %c0_53 = arith.constant 0 : index
    %c0_54 = arith.constant 0 : index
    %c0_55 = arith.constant 0 : index
    %128 = vector.load %arg14[%c0_53, %c0_54, %c0_55] : memref<1x256x128xbf16, #tpu.memory_space<vmem>>, vector<1x256x128xbf16>
    %129 = vector.shape_cast %128 : vector<1x256x128xbf16> to vector<256x128xbf16>
    %cst_56 = arith.constant dense<0.000000e+00> : vector<16x128xf32>
    %130 = tpu.matmul %127, %129, %cst_56 {dimension_numbers = #tpu.dot_dimension_numbers<[1], [0], [0], [1], [0, 0, 1, 1], [], []>} : vector<16x256xbf16>, vector<256x128xbf16>, vector<16x128xf32> -> vector<16x128xf32>
    %c0_57 = arith.constant 0 : index
    %c0_58 = arith.constant 0 : index
    %c0_59 = arith.constant 0 : index
    %131 = vector.load %arg15[%c0_57, %c0_58, %c0_59] : memref<1x1x128xf32, #tpu.memory_space<vmem>>, vector<1x1x128xf32>
    %132 = vector.shape_cast %131 : vector<1x1x128xf32> to vector<1x128xf32>
    %133 = vector.broadcast %132 : vector<1x128xf32> to vector<16x128xf32>
    %134 = arith.addf %130, %133 : vector<16x128xf32>
    %135 = arith.addf %105, %134 : vector<16x128xf32>
    %c0_60 = arith.constant 0 : index
    %c0_61 = arith.constant 0 : index
    %c0_62 = arith.constant 0 : index
    %136 = vector.load %arg16[%c0_60, %c0_61, %c0_62] : memref<1x1x128xf32, #tpu.memory_space<vmem>>, vector<1x1x128xf32>
    %137 = vector.shape_cast %136 : vector<1x1x128xf32> to vector<1x128xf32>
    %c0_63 = arith.constant 0 : index
    %c0_64 = arith.constant 0 : index
    %c0_65 = arith.constant 0 : index
    %138 = vector.load %arg17[%c0_63, %c0_64, %c0_65] : memref<1x1x128xf32, #tpu.memory_space<vmem>>, vector<1x1x128xf32>
    %139 = vector.shape_cast %138 : vector<1x1x128xf32> to vector<1x128xf32>
    %cst_66 = arith.constant dense<0.000000e+00> : vector<16xf32>
    %140 = vector.multi_reduction <add>, %135, %cst_66 [1] : vector<16x128xf32> to vector<16xf32>
    %141 = vector.shape_cast %140 : vector<16xf32> to vector<16x1xf32>
    %cst_67 = arith.constant 1.280000e+02 : f32
    %142 = vector.broadcast %cst_67 : f32 to vector<16x1xf32>
    %143 = arith.divf %141, %142 : vector<16x1xf32>
    %144 = vector.broadcast %143 : vector<16x1xf32> to vector<16x128xf32>
    %145 = arith.subf %135, %144 : vector<16x128xf32>
    %146 = arith.mulf %145, %145 : vector<16x128xf32>
    %cst_68 = arith.constant dense<0.000000e+00> : vector<16xf32>
    %147 = vector.multi_reduction <add>, %146, %cst_68 [1] : vector<16x128xf32> to vector<16xf32>
    %148 = vector.shape_cast %147 : vector<16xf32> to vector<16x1xf32>
    %cst_69 = arith.constant 1.280000e+02 : f32
    %149 = vector.broadcast %cst_69 : f32 to vector<16x1xf32>
    %150 = arith.divf %148, %149 : vector<16x1xf32>
    %151 = vector.broadcast %143 : vector<16x1xf32> to vector<16x128xf32>
    %152 = arith.subf %135, %151 : vector<16x128xf32>
    %cst_70 = arith.constant 9.99999996E-13 : f32
    %153 = vector.broadcast %cst_70 : f32 to vector<16x1xf32>
    %154 = arith.addf %150, %153 : vector<16x1xf32>
    %155 = math.rsqrt %154 : vector<16x1xf32>
    %156 = vector.broadcast %155 : vector<16x1xf32> to vector<16x128xf32>
    %157 = arith.mulf %152, %156 : vector<16x128xf32>
    %158 = vector.broadcast %137 : vector<1x128xf32> to vector<16x128xf32>
    %159 = arith.mulf %157, %158 : vector<16x128xf32>
    %160 = vector.broadcast %139 : vector<1x128xf32> to vector<16x128xf32>
    %161 = arith.addf %159, %160 : vector<16x128xf32>
    %c0_71 = arith.constant 0 : index
    %c0_72 = arith.constant 0 : index
    %162 = vector.load %arg19[%c0_71, %c0_72] : memref<16x128xf32, #tpu.memory_space<vmem>>, vector<16x128xf32>
    tpu.vector_store %arg19[%c0_71, %c0_72], %161 {strides = array<i32>} : memref<16x128xf32, #tpu.memory_space<vmem>>, vector<16x128xf32>,
    %c1_i32 = arith.constant 1 : i32
    %163 = arith.cmpi eq, %arg1, %c1_i32 : i32
    %164 = arith.extui %163 : i1 to i32
    %c0_i32_73 = arith.constant 0 : i32
    %165 = arith.cmpi ne, %164, %c0_i32_73 : i32
    scf.if %165 {
      %c0_74 = arith.constant 0 : index
      %c0_75 = arith.constant 0 : index
      %166 = vector.load %arg18[%c0_74, %c0_75] : memref<16x128xf32, #tpu.memory_space<vmem>>, vector<16x128xf32>
      tpu.vector_store %arg18[%c0_74, %c0_75], %161 {strides = array<i32>} : memref<16x128xf32, #tpu.memory_space<vmem>>, vector<16x128xf32>,
    } else {
    }
    return
  }
  func.func @transform_0(%arg0: i32, %arg1: i32) -> (i32, i32) {
    %c0_i32 = arith.constant 0 : i32
    %c0_i32_0 = arith.constant 0 : i32
    return %arg0, %c0_i32 : i32, i32
  }
  func.func @transform_1(%arg0: i32, %arg1: i32) -> (i32, i32) {
    %c0_i32 = arith.constant 0 : i32
    %c0_i32_0 = arith.constant 0 : i32
    %c0_i32_1 = arith.constant 0 : i32
    return %c0_i32, %c0_i32_0 : i32, i32
  }
  func.func @transform_2(%arg0: i32, %arg1: i32) -> (i32, i32) {
    %c0_i32 = arith.constant 0 : i32
    %c0_i32_0 = arith.constant 0 : i32
    %c0_i32_1 = arith.constant 0 : i32
    return %c0_i32, %c0_i32_0 : i32, i32
  }
  func.func @transform_3(%arg0: i32, %arg1: i32) -> (i32, i32) {
    %c0_i32 = arith.constant 0 : i32
    %c0_i32_0 = arith.constant 0 : i32
    %c0_i32_1 = arith.constant 0 : i32
    return %c0_i32, %c0_i32_0 : i32, i32
  }
  func.func @transform_4(%arg0: i32, %arg1: i32) -> (i32, i32, i32) {
    %c0_i32 = arith.constant 0 : i32
    %c0_i32_0 = arith.constant 0 : i32
    %c0_i32_1 = arith.constant 0 : i32
    return %arg1, %c0_i32, %c0_i32_0 : i32, i32, i32
  }
  func.func @transform_5(%arg0: i32, %arg1: i32) -> (i32, i32, i32) {
    %c0_i32 = arith.constant 0 : i32
    %c0_i32_0 = arith.constant 0 : i32
    %c0_i32_1 = arith.constant 0 : i32
    return %arg1, %c0_i32, %c0_i32_0 : i32, i32, i32
  }
  func.func @transform_6(%arg0: i32, %arg1: i32) -> (i32, i32, i32) {
    %c0_i32 = arith.constant 0 : i32
    %c0_i32_0 = arith.constant 0 : i32
    %c0_i32_1 = arith.constant 0 : i32
    return %arg1, %c0_i32, %c0_i32_0 : i32, i32, i32
  }
  func.func @transform_7(%arg0: i32, %arg1: i32) -> (i32, i32, i32) {
    %c0_i32 = arith.constant 0 : i32
    %c0_i32_0 = arith.constant 0 : i32
    %c0_i32_1 = arith.constant 0 : i32
    return %arg1, %c0_i32, %c0_i32_0 : i32, i32, i32
  }
  func.func @transform_8(%arg0: i32, %arg1: i32) -> (i32, i32, i32) {
    %c0_i32 = arith.constant 0 : i32
    %c0_i32_0 = arith.constant 0 : i32
    %c0_i32_1 = arith.constant 0 : i32
    return %arg1, %c0_i32, %c0_i32_0 : i32, i32, i32
  }
  func.func @transform_9(%arg0: i32, %arg1: i32) -> (i32, i32, i32) {
    %c0_i32 = arith.constant 0 : i32
    %c0_i32_0 = arith.constant 0 : i32
    %c0_i32_1 = arith.constant 0 : i32
    return %arg1, %c0_i32, %c0_i32_0 : i32, i32, i32
  }
  func.func @transform_10(%arg0: i32, %arg1: i32) -> (i32, i32, i32) {
    %c0_i32 = arith.constant 0 : i32
    %c0_i32_0 = arith.constant 0 : i32
    %c0_i32_1 = arith.constant 0 : i32
    return %arg1, %c0_i32, %c0_i32_0 : i32, i32, i32
  }
  func.func @transform_11(%arg0: i32, %arg1: i32) -> (i32, i32, i32) {
    %c0_i32 = arith.constant 0 : i32
    %c0_i32_0 = arith.constant 0 : i32
    %c0_i32_1 = arith.constant 0 : i32
    return %arg1, %c0_i32, %c0_i32_0 : i32, i32, i32
  }
  func.func @transform_12(%arg0: i32, %arg1: i32) -> (i32, i32, i32) {
    %c0_i32 = arith.constant 0 : i32
    %c0_i32_0 = arith.constant 0 : i32
    %c0_i32_1 = arith.constant 0 : i32
    return %arg1, %c0_i32, %c0_i32_0 : i32, i32, i32
  }
  func.func @transform_13(%arg0: i32, %arg1: i32) -> (i32, i32, i32) {
    %c0_i32 = arith.constant 0 : i32
    %c0_i32_0 = arith.constant 0 : i32
    %c0_i32_1 = arith.constant 0 : i32
    return %arg1, %c0_i32, %c0_i32_0 : i32, i32, i32
  }
  func.func @transform_14(%arg0: i32, %arg1: i32) -> (i32, i32, i32) {
    %c0_i32 = arith.constant 0 : i32
    %c0_i32_0 = arith.constant 0 : i32
    %c0_i32_1 = arith.constant 0 : i32
    return %arg1, %c0_i32, %c0_i32_0 : i32, i32, i32
  }
  func.func @transform_15(%arg0: i32, %arg1: i32) -> (i32, i32, i32) {
    %c0_i32 = arith.constant 0 : i32
    %c0_i32_0 = arith.constant 0 : i32
    %c0_i32_1 = arith.constant 0 : i32
    return %arg1, %c0_i32, %c0_i32_0 : i32, i32, i32
  }
  func.func @transform_16(%arg0: i32, %arg1: i32) -> (i32, i32) {
    %c0_i32 = arith.constant 0 : i32
    %c0_i32_0 = arith.constant 0 : i32
    return %arg0, %c0_i32 : i32, i32
  }
}

</mosaic_0001>

<llo_original>
// kernel: tpu_custom_call.1
$region0: #{tpu_custom_call.1}
  #allocation0 [shape = 'u32[]', space=smem, size = 0x4, offset = 0x4, fixed_abs, tag = 'smem constant byte address 0x4 - core index']
  #allocation1 [shape = 'u32[144,128]{1,0:T(1,128)}', space=vmem, size = 0x12000, scoped, tag = 'internal scratch']
  #allocation2 [shape = 'f32[16,128]{1,0:T(8,128)}', space=vmem, size = 0x2000, scoped, tag = 'scratch operand']
  %s0 = inlined_call_operand.vmem [shape: f32[16,128], index: 0, kind: input, shape index: {}]
  %s1 = inlined_call_operand.vmem [shape: f32[1,128], index: 1, kind: input, shape index: {}]
  %s2 = inlined_call_operand.vmem [shape: f32[1,128], index: 2, kind: input, shape index: {}]
  %s3 = inlined_call_operand.vmem [shape: f32[64,16], index: 3, kind: input, shape index: {}]
  %s4 = inlined_call_operand.hbm [shape: bf16[2,128,384], index: 4, kind: input, shape index: {}]
  %s5 = inlined_call_operand.vmem [shape: f32[2,1,384], index: 5, kind: input, shape index: {}]
  %s6 = inlined_call_operand.hbm [shape: bf16[2,128,128], index: 6, kind: input, shape index: {}]
  %s7 = inlined_call_operand.vmem [shape: f32[2,1,128], index: 7, kind: input, shape index: {}]
  %s8 = inlined_call_operand.vmem [shape: f32[2,1,128], index: 8, kind: input, shape index: {}]
  %s9 = inlined_call_operand.vmem [shape: f32[2,1,128], index: 9, kind: input, shape index: {}]
  %s10 = inlined_call_operand.hbm [shape: bf16[2,128,256], index: 10, kind: input, shape index: {}]
  %s11 = inlined_call_operand.vmem [shape: f32[2,1,256], index: 11, kind: input, shape index: {}]
  %s12 = inlined_call_operand.hbm [shape: bf16[2,256,128], index: 12, kind: input, shape index: {}]
  %s13 = inlined_call_operand.vmem [shape: f32[2,1,128], index: 13, kind: input, shape index: {}]
  %s14 = inlined_call_operand.vmem [shape: f32[2,1,128], index: 14, kind: input, shape index: {}]
  %s15 = inlined_call_operand.vmem [shape: f32[2,1,128], index: 15, kind: input, shape index: {}]
  %s16 = inlined_call_operand.hbm [shape: f32[16,128], index: 16, kind: output, shape index: {}]
  %s17 = sld [smem:[#allocation0]]
  $region121: #{tpu_custom_call.1} parent=0
    _
  %s19 = ssub.s32 1, %s17
  %s20 = scalar_select 0, %s19, %s17
  $region1: #{tpu_custom_call.1} parent=0
    #allocation3 [shape = 'u8[196608]{0}', space=vmem, size = 0x30000, scoped, tag = 'input window, operand 4']
    #allocation4 [shape = 's32[2]{0}', space=sflag, size = 0x8, scoped, tag = 'scoped memory for tpu_custom_call.1']
    #allocation5 [shape = 's32[2]{0}', space=sflag, size = 0x8, scoped, tag = 'scoped memory for tpu_custom_call.1']
    #allocation6 [shape = 'u8[65536]{0}', space=vmem, size = 0x10000, scoped, tag = 'input window, operand 6']
    #allocation7 [shape = 's32[2]{0}', space=sflag, size = 0x8, scoped, tag = 'scoped memory for tpu_custom_call.1']
    #allocation8 [shape = 'u8[131072]{0}', space=vmem, size = 0x20000, scoped, tag = 'input window, operand 10']
    #allocation9 [shape = 'u8[131072]{0}', space=vmem, size = 0x20000, scoped, tag = 'input window, operand 12']
    #allocation10 [shape = 's32[2]{0}', space=sflag, size = 0x8, scoped, tag = 'scoped memory for tpu_custom_call.1']
    #allocation11 [shape = 'u8[8192]{0}', space=vmem, size = 0x2000, scoped, tag = 'output window, operand 0, single buffered']
    %21 = vsyncpa [#allocation4], 0
    %s22 = scalar_lea.sflag [#allocation4], 1
    %23 = vsyncpa %s22, 0
    %24 = vsyncpa [#allocation7], 0
    %s25 = scalar_lea.sflag [#allocation7], 1
    %26 = vsyncpa %s25, 0
    %27 = vsyncpa [#allocation10], 0
    %s28 = scalar_lea.sflag [#allocation10], 1
    %29 = vsyncpa %s28, 0
    %30 = vsyncpa [#allocation5], 0
    loop: start=0, step=1, limit=4
    $region2: #{tpu_custom_call.1} parent=1 // loop_pre_header
      _
    $region3: #{tpu_custom_call.1} parent=1 // loop_header
      %s32 = sphi 0, %s36
      %p33 = scmp.ge.s32.totalorder %s32, 4
      %s39 = sphi 0, %s51
      %s40 = sphi 0, %s47
      %s41 = sphi 0, %s39
      %s42 = sphi 0, %s40
      %s43 = sphi 0, %s41
      %s44 = sphi 0, %s42
      %s54 = sphi 0, %s56
      %s57 = sphi 0, %s54
      %s58 = sphi 0, %s57
      %s74 = sphi 0, %s58
      %s78 = sphi 0, %s78
      %s80 = sphi 0, %s78
      %s81 = sphi 0, %s80
      %s95 = sphi 0, %s81
      %s99 = sphi 0, %s99
      %s101 = sphi 0, %s99
      %s102 = sphi 0, %s101
      %s116 = sphi 0, %s102
      %s120 = sphi 0, %s120
      %s122 = sphi 0, %s120
      %s123 = sphi 0, %s122
      %s137 = sphi 0, %s123
      %s143 = sphi 0, %s145
      %s146 = sphi 0, %s143
      %s147 = sphi 0, %s146
      %s163 = sphi 0, %s147
      %s169 = sphi 0, %s171
      %s172 = sphi 0, %s169
      %s173 = sphi 0, %s172
      %s189 = sphi 0, %s173
      %s195 = sphi 0, %s197
      %s198 = sphi 0, %s195
      %s199 = sphi 0, %s198
      %s215 = sphi 0, %s199
      %s221 = sphi 0, %s223
      %s224 = sphi 0, %s221
      %s225 = sphi 0, %s224
      %s241 = sphi 0, %s225
      %s247 = sphi 0, %s249
      %s250 = sphi 0, %s247
      %s251 = sphi 0, %s250
      %s267 = sphi 0, %s251
      %s273 = sphi 0, %s275
      %s276 = sphi 0, %s273
      %s277 = sphi 0, %s276
      %s293 = sphi 0, %s277
      %s299 = sphi 0, %s301
      %s302 = sphi 0, %s299
      %s303 = sphi 0, %s302
      %s319 = sphi 0, %s303
      %s325 = sphi 0, %s327
      %s328 = sphi 0, %s325
      %s329 = sphi 0, %s328
      %s345 = sphi 0, %s329
      %s351 = sphi 0, %s353
      %s354 = sphi 0, %s351
      %s355 = sphi 0, %s354
      %s371 = sphi 0, %s355
      %s377 = sphi 0, %s379
      %s380 = sphi 0, %s377
      %s381 = sphi 0, %s380
      %s397 = sphi 0, %s381
      %s403 = sphi 0, %s405
      %s406 = sphi 0, %s403
      %s407 = sphi 0, %s406
      %s423 = sphi 0, %s407
      %s429 = sphi 0, %s431
      %s432 = sphi 0, %s429
      %s433 = sphi 0, %s432
      %s449 = sphi 0, %s433
      %s455 = sphi 0, %s457
      %s458 = sphi 0, %s455
      %s459 = sphi 0, %s458
      %s475 = sphi 0, %s459
    $region4: #{tpu_custom_call.1} parent=1 // loop_header_branch
      %35 = sbr.rel (%p33) target = $region8
    $region5: #{tpu_custom_call.1} parent=1 // loop_body
      %s37 = ssub.s32 %s32, 1
      %s38 = ssub.s32 %s32, 2
      %s45 = sadd.s32 1, %s40
      %p46 = scmp.ge.s32.totalorder %s45, 2
      %s47 = scalar_select %p46, 0, %s45
      %s48 = sadd.s32 1, %s39
      %s49 = scalar_select %p46, %s48, %s39
      %p50 = scmp.ge.s32.totalorder %s49, 1
      %s51 = scalar_select %p50, 0, %s49
      %s52 = ssub.s32 %s39, %s51
      %p53 = scmp.eq.s32.totalorder %s52, 0
      %s55 = sadd.s32 %s54, 1
      %s56 = scalar_select %p53, %s54, %s55
      %p59 = pneg %p53
      %p60 = scmp.eq.s32.totalorder %s32, 1
      %p61 = por %p59, %p60
      %p62 = scmp.ne.s32.totalorder %s54, %s57
      %p63 = scmp.eq.s32.totalorder %s32, 0
      %p64 = por %p62, %p63
      %p65 = scmp.ne.s32.totalorder %s54, %s57
      %p66 = scmp.eq.s32.totalorder %s37, 1
      %p67 = por %p65, %p66
      %p68 = scmp.ne.s32.totalorder %s57, %s58
      %p69 = scmp.eq.s32.totalorder %s37, 0
      %p70 = por %p68, %p69
      %p71 = scmp.ne.s32.totalorder %s57, %s58
      %p72 = scmp.eq.s32.totalorder %s38, 1
      %p73 = por %p71, %p72
      %p75 = scmp.ne.s32.totalorder %s58, %s74
      %p76 = scmp.eq.s32.totalorder %s38, 0
      %p77 = por %p75, %p76
      %s79 = sadd.s32 %s78, 1
      %p82 = scmp.eq.s32.totalorder %s32, 1
      %p83 = scmp.ne.s32.totalorder %s78, %s80
      %p84 = scmp.eq.s32.totalorder %s32, 0
      %p85 = por %p83, %p84
      %p86 = scmp.ne.s32.totalorder %s78, %s80
      %p87 = scmp.eq.s32.totalorder %s37, 1
      %p88 = por %p86, %p87
      %p89 = scmp.ne.s32.totalorder %s80, %s81
      %p90 = scmp.eq.s32.totalorder %s37, 0
      %p91 = por %p89, %p90
      %p92 = scmp.ne.s32.totalorder %s80, %s81
      %p93 = scmp.eq.s32.totalorder %s38, 1
      %p94 = por %p92, %p93
      %p96 = scmp.ne.s32.totalorder %s81, %s95
      %p97 = scmp.eq.s32.totalorder %s38, 0
      %p98 = por %p96, %p97
      %s100 = sadd.s32 %s99, 1
      %p103 = scmp.eq.s32.totalorder %s32, 1
      %p104 = scmp.ne.s32.totalorder %s99, %s101
      %p105 = scmp.eq.s32.totalorder %s32, 0
      %p106 = por %p104, %p105
      %p107 = scmp.ne.s32.totalorder %s99, %s101
      %p108 = scmp.eq.s32.totalorder %s37, 1
      %p109 = por %p107, %p108
      %p110 = scmp.ne.s32.totalorder %s101, %s102
      %p111 = scmp.eq.s32.totalorder %s37, 0
      %p112 = por %p110, %p111
      %p113 = scmp.ne.s32.totalorder %s101, %s102
      %p114 = scmp.eq.s32.totalorder %s38, 1
      %p115 = por %p113, %p114
      %p117 = scmp.ne.s32.totalorder %s102, %s116
      %p118 = scmp.eq.s32.totalorder %s38, 0
      %p119 = por %p117, %p118
      %s121 = sadd.s32 %s120, 1
      %p124 = scmp.eq.s32.totalorder %s32, 1
      %p125 = scmp.ne.s32.totalorder %s120, %s122
      %p126 = scmp.eq.s32.totalorder %s32, 0
      %p127 = por %p125, %p126
      %p128 = scmp.ne.s32.totalorder %s120, %s122
      %p129 = scmp.eq.s32.totalorder %s37, 1
      %p130 = por %p128, %p129
      %p131 = scmp.ne.s32.totalorder %s122, %s123
      %p132 = scmp.eq.s32.totalorder %s37, 0
      %p133 = por %p131, %p132
      %p134 = scmp.ne.s32.totalorder %s122, %s123
      %p135 = scmp.eq.s32.totalorder %s38, 1
      %p136 = por %p134, %p135
      %p138 = scmp.ne.s32.totalorder %s123, %s137
      %p139 = scmp.eq.s32.totalorder %s38, 0
      %p140 = por %p138, %p139
      %s141 = ssub.s32 %s40, %s47
      %p142 = scmp.eq.s32.totalorder %s141, 0
      %s144 = sadd.s32 %s143, 1
      %s145 = scalar_select %p142, %s143, %s144
      %p148 = pneg %p142
      %p149 = scmp.eq.s32.totalorder %s32, 1
      %p150 = por %p148, %p149
      %p151 = scmp.ne.s32.totalorder %s143, %s146
      %p152 = scmp.eq.s32.totalorder %s32, 0
      %p153 = por %p151, %p152
      %p154 = scmp.ne.s32.totalorder %s143, %s146
      %p155 = scmp.eq.s32.totalorder %s37, 1
      %p156 = por %p154, %p155
      %p157 = scmp.ne.s32.totalorder %s146, %s147
      %p158 = scmp.eq.s32.totalorder %s37, 0
      %p159 = por %p157, %p158
      %p160 = scmp.ne.s32.totalorder %s146, %s147
      %p161 = scmp.eq.s32.totalorder %s38, 1
      %p162 = por %p160, %p161
      %p164 = scmp.ne.s32.totalorder %s147, %s163
      %p165 = scmp.eq.s32.totalorder %s38, 0
      %p166 = por %p164, %p165
      %s167 = ssub.s32 %s40, %s47
      %p168 = scmp.eq.s32.totalorder %s167, 0
      %s170 = sadd.s32 %s169, 1
      %s171 = scalar_select %p168, %s169, %s170
      %p174 = pneg %p168
      %p175 = scmp.eq.s32.totalorder %s32, 1
      %p176 = por %p174, %p175
      %p177 = scmp.ne.s32.totalorder %s169, %s172
      %p178 = scmp.eq.s32.totalorder %s32, 0
      %p179 = por %p177, %p178
      %p180 = scmp.ne.s32.totalorder %s169, %s172
      %p181 = scmp.eq.s32.totalorder %s37, 1
      %p182 = por %p180, %p181
      %p183 = scmp.ne.s32.totalorder %s172, %s173
      %p184 = scmp.eq.s32.totalorder %s37, 0
      %p185 = por %p183, %p184
      %p186 = scmp.ne.s32.totalorder %s172, %s173
      %p187 = scmp.eq.s32.totalorder %s38, 1
      %p188 = por %p186, %p187
      %p190 = scmp.ne.s32.totalorder %s173, %s189
      %p191 = scmp.eq.s32.totalorder %s38, 0
      %p192 = por %p190, %p191
      %s193 = ssub.s32 %s40, %s47
      %p194 = scmp.eq.s32.totalorder %s193, 0
      %s196 = sadd.s32 %s195, 1
      %s197 = scalar_select %p194, %s195, %s196
      %p200 = pneg %p194
      %p201 = scmp.eq.s32.totalorder %s32, 1
      %p202 = por %p200, %p201
      %p203 = scmp.ne.s32.totalorder %s195, %s198
      %p204 = scmp.eq.s32.totalorder %s32, 0
      %p205 = por %p203, %p204
      %p206 = scmp.ne.s32.totalorder %s195, %s198
      %p207 = scmp.eq.s32.totalorder %s37, 1
      %p208 = por %p206, %p207
      %p209 = scmp.ne.s32.totalorder %s198, %s199
      %p210 = scmp.eq.s32.totalorder %s37, 0
      %p211 = por %p209, %p210
      %p212 = scmp.ne.s32.totalorder %s198, %s199
      %p213 = scmp.eq.s32.totalorder %s38, 1
      %p214 = por %p212, %p213
      %p216 = scmp.ne.s32.totalorder %s199, %s215
      %p217 = scmp.eq.s32.totalorder %s38, 0
      %p218 = por %p216, %p217
      %s219 = ssub.s32 %s40, %s47
      %p220 = scmp.eq.s32.totalorder %s219, 0
      %s222 = sadd.s32 %s221, 1
      %s223 = scalar_select %p220, %s221, %s222
      %p226 = pneg %p220
      %p227 = scmp.eq.s32.totalorder %s32, 1
      %p228 = por %p226, %p227
      %p229 = scmp.ne.s32.totalorder %s221, %s224
      %p230 = scmp.eq.s32.totalorder %s32, 0
      %p231 = por %p229, %p230
      %p232 = scmp.ne.s32.totalorder %s221, %s224
      %p233 = scmp.eq.s32.totalorder %s37, 1
      %p234 = por %p232, %p233
      %p235 = scmp.ne.s32.totalorder %s224, %s225
      %p236 = scmp.eq.s32.totalorder %s37, 0
      %p237 = por %p235, %p236
      %p238 = scmp.ne.s32.totalorder %s224, %s225
      %p239 = scmp.eq.s32.totalorder %s38, 1
      %p240 = por %p238, %p239
      %p242 = scmp.ne.s32.totalorder %s225, %s241
      %p243 = scmp.eq.s32.totalorder %s38, 0
      %p244 = por %p242, %p243
      %s245 = ssub.s32 %s40, %s47
      %p246 = scmp.eq.s32.totalorder %s245, 0
      %s248 = sadd.s32 %s247, 1
      %s249 = scalar_select %p246, %s247, %s248
      %p252 = pneg %p246
      %p253 = scmp.eq.s32.totalorder %s32, 1
      %p254 = por %p252, %p253
      %p255 = scmp.ne.s32.totalorder %s247, %s250
      %p256 = scmp.eq.s32.totalorder %s32, 0
      %p257 = por %p255, %p256
      %p258 = scmp.ne.s32.totalorder %s247, %s250
      %p259 = scmp.eq.s32.totalorder %s37, 1
      %p260 = por %p258, %p259
      %p261 = scmp.ne.s32.totalorder %s250, %s251
      %p262 = scmp.eq.s32.totalorder %s37, 0
      %p263 = por %p261, %p262
      %p264 = scmp.ne.s32.totalorder %s250, %s251
      %p265 = scmp.eq.s32.totalorder %s38, 1
      %p266 = por %p264, %p265
      %p268 = scmp.ne.s32.totalorder %s251, %s267
      %p269 = scmp.eq.s32.totalorder %s38, 0
      %p270 = por %p268, %p269
      %s271 = ssub.s32 %s40, %s47
      %p272 = scmp.eq.s32.totalorder %s271, 0
      %s274 = sadd.s32 %s273, 1
      %s275 = scalar_select %p272, %s273, %s274
      %p278 = pneg %p272
      %p279 = scmp.eq.s32.totalorder %s32, 1
      %p280 = por %p278, %p279
      %p281 = scmp.ne.s32.totalorder %s273, %s276
      %p282 = scmp.eq.s32.totalorder %s32, 0
      %p283 = por %p281, %p282
      %p284 = scmp.ne.s32.totalorder %s273, %s276
      %p285 = scmp.eq.s32.totalorder %s37, 1
      %p286 = por %p284, %p285
      %p287 = scmp.ne.s32.totalorder %s276, %s277
      %p288 = scmp.eq.s32.totalorder %s37, 0
      %p289 = por %p287, %p288
      %p290 = scmp.ne.s32.totalorder %s276, %s277
      %p291 = scmp.eq.s32.totalorder %s38, 1
      %p292 = por %p290, %p291
      %p294 = scmp.ne.s32.totalorder %s277, %s293
      %p295 = scmp.eq.s32.totalorder %s38, 0
      %p296 = por %p294, %p295
      %s297 = ssub.s32 %s40, %s47
      %p298 = scmp.eq.s32.totalorder %s297, 0
      %s300 = sadd.s32 %s299, 1
      %s301 = scalar_select %p298, %s299, %s300
      %p304 = pneg %p298
      %p305 = scmp.eq.s32.totalorder %s32, 1
      %p306 = por %p304, %p305
      %p307 = scmp.ne.s32.totalorder %s299, %s302
      %p308 = scmp.eq.s32.totalorder %s32, 0
      %p309 = por %p307, %p308
      %p310 = scmp.ne.s32.totalorder %s299, %s302
      %p311 = scmp.eq.s32.totalorder %s37, 1
      %p312 = por %p310, %p311
      %p313 = scmp.ne.s32.totalorder %s302, %s303
      %p314 = scmp.eq.s32.totalorder %s37, 0
      %p315 = por %p313, %p314
      %p316 = scmp.ne.s32.totalorder %s302, %s303
      %p317 = scmp.eq.s32.totalorder %s38, 1
      %p318 = por %p316, %p317
      %p320 = scmp.ne.s32.totalorder %s303, %s319
      %p321 = scmp.eq.s32.totalorder %s38, 0
      %p322 = por %p320, %p321
      %s323 = ssub.s32 %s40, %s47
      %p324 = scmp.eq.s32.totalorder %s323, 0
      %s326 = sadd.s32 %s325, 1
      %s327 = scalar_select %p324, %s325, %s326
      %p330 = pneg %p324
      %p331 = scmp.eq.s32.totalorder %s32, 1
      %p332 = por %p330, %p331
      %p333 = scmp.ne.s32.totalorder %s325, %s328
      %p334 = scmp.eq.s32.totalorder %s32, 0
      %p335 = por %p333, %p334
      %p336 = scmp.ne.s32.totalorder %s325, %s328
      %p337 = scmp.eq.s32.totalorder %s37, 1
      %p338 = por %p336, %p337
      %p339 = scmp.ne.s32.totalorder %s328, %s329
      %p340 = scmp.eq.s32.totalorder %s37, 0
      %p341 = por %p339, %p340
      %p342 = scmp.ne.s32.totalorder %s328, %s329
      %p343 = scmp.eq.s32.totalorder %s38, 1
      %p344 = por %p342, %p343
      %p346 = scmp.ne.s32.totalorder %s329, %s345
      %p347 = scmp.eq.s32.totalorder %s38, 0
      %p348 = por %p346, %p347
      %s349 = ssub.s32 %s40, %s47
      %p350 = scmp.eq.s32.totalorder %s349, 0
      %s352 = sadd.s32 %s351, 1
      %s353 = scalar_select %p350, %s351, %s352
      %p356 = pneg %p350
      %p357 = scmp.eq.s32.totalorder %s32, 1
      %p358 = por %p356, %p357
      %p359 = scmp.ne.s32.totalorder %s351, %s354
      %p360 = scmp.eq.s32.totalorder %s32, 0
      %p361 = por %p359, %p360
      %p362 = scmp.ne.s32.totalorder %s351, %s354
      %p363 = scmp.eq.s32.totalorder %s37, 1
      %p364 = por %p362, %p363
      %p365 = scmp.ne.s32.totalorder %s354, %s355
      %p366 = scmp.eq.s32.totalorder %s37, 0
      %p367 = por %p365, %p366
      %p368 = scmp.ne.s32.totalorder %s354, %s355
      %p369 = scmp.eq.s32.totalorder %s38, 1
      %p370 = por %p368, %p369
      %p372 = scmp.ne.s32.totalorder %s355, %s371
      %p373 = scmp.eq.s32.totalorder %s38, 0
      %p374 = por %p372, %p373
      %s375 = ssub.s32 %s40, %s47
      %p376 = scmp.eq.s32.totalorder %s375, 0
      %s378 = sadd.s32 %s377, 1
      %s379 = scalar_select %p376, %s377, %s378
      %p382 = pneg %p376
      %p383 = scmp.eq.s32.totalorder %s32, 1
      %p384 = por %p382, %p383
      %p385 = scmp.ne.s32.totalorder %s377, %s380
      %p386 = scmp.eq.s32.totalorder %s32, 0
      %p387 = por %p385, %p386
      %p388 = scmp.ne.s32.totalorder %s377, %s380
      %p389 = scmp.eq.s32.totalorder %s37, 1
      %p390 = por %p388, %p389
      %p391 = scmp.ne.s32.totalorder %s380, %s381
      %p392 = scmp.eq.s32.totalorder %s37, 0
      %p393 = por %p391, %p392
      %p394 = scmp.ne.s32.totalorder %s380, %s381
      %p395 = scmp.eq.s32.totalorder %s38, 1
      %p396 = por %p394, %p395
      %p398 = scmp.ne.s32.totalorder %s381, %s397
      %p399 = scmp.eq.s32.totalorder %s38, 0
      %p400 = por %p398, %p399
      %s401 = ssub.s32 %s40, %s47
      %p402 = scmp.eq.s32.totalorder %s401, 0
      %s404 = sadd.s32 %s403, 1
      %s405 = scalar_select %p402, %s403, %s404
      %p408 = pneg %p402
      %p409 = scmp.eq.s32.totalorder %s32, 1
      %p410 = por %p408, %p409
      %p411 = scmp.ne.s32.totalorder %s403, %s406
      %p412 = scmp.eq.s32.totalorder %s32, 0
      %p413 = por %p411, %p412
      %p414 = scmp.ne.s32.totalorder %s403, %s406
      %p415 = scmp.eq.s32.totalorder %s37, 1
      %p416 = por %p414, %p415
      %p417 = scmp.ne.s32.totalorder %s406, %s407
      %p418 = scmp.eq.s32.totalorder %s37, 0
      %p419 = por %p417, %p418
      %p420 = scmp.ne.s32.totalorder %s406, %s407
      %p421 = scmp.eq.s32.totalorder %s38, 1
      %p422 = por %p420, %p421
      %p424 = scmp.ne.s32.totalorder %s407, %s423
      %p425 = scmp.eq.s32.totalorder %s38, 0
      %p426 = por %p424, %p425
      %s427 = ssub.s32 %s40, %s47
      %p428 = scmp.eq.s32.totalorder %s427, 0
      %s430 = sadd.s32 %s429, 1
      %s431 = scalar_select %p428, %s429, %s430
      %p434 = pneg %p428
      %p435 = scmp.eq.s32.totalorder %s32, 1
      %p436 = por %p434, %p435
      %p437 = scmp.ne.s32.totalorder %s429, %s432
      %p438 = scmp.eq.s32.totalorder %s32, 0
      %p439 = por %p437, %p438
      %p440 = scmp.ne.s32.totalorder %s429, %s432
      %p441 = scmp.eq.s32.totalorder %s37, 1
      %p442 = por %p440, %p441
      %p443 = scmp.ne.s32.totalorder %s432, %s433
      %p444 = scmp.eq.s32.totalorder %s37, 0
      %p445 = por %p443, %p444
      %p446 = scmp.ne.s32.totalorder %s432, %s433
      %p447 = scmp.eq.s32.totalorder %s38, 1
      %p448 = por %p446, %p447
      %p450 = scmp.ne.s32.totalorder %s433, %s449
      %p451 = scmp.eq.s32.totalorder %s38, 0
      %p452 = por %p450, %p451
      %s453 = ssub.s32 %s39, %s51
      %p454 = scmp.eq.s32.totalorder %s453, 0
      %s456 = sadd.s32 %s455, 1
      %s457 = scalar_select %p454, %s455, %s456
      %p460 = pneg %p454
      %p461 = scmp.eq.s32.totalorder %s32, 1
      %p462 = por %p460, %p461
      %p463 = scmp.ne.s32.totalorder %s455, %s458
      %p464 = scmp.eq.s32.totalorder %s32, 0
      %p465 = por %p463, %p464
      %p466 = scmp.ne.s32.totalorder %s455, %s458
      %p467 = scmp.eq.s32.totalorder %s37, 1
      %p468 = por %p466, %p467
      %p469 = scmp.ne.s32.totalorder %s458, %s459
      %p470 = scmp.eq.s32.totalorder %s37, 0
      %p471 = por %p469, %p470
      %p472 = scmp.ne.s32.totalorder %s458, %s459
      %p473 = scmp.eq.s32.totalorder %s38, 1
      %p474 = por %p472, %p473
      %p476 = scmp.ne.s32.totalorder %s459, %s475
      %p477 = scmp.eq.s32.totalorder %s38, 0
      %p478 = por %p476, %p477
      %p479 = scmp.le.s32.totalorder 1, %s32
      %p480 = scmp.lt.s32.totalorder %s32, 3
      %p481 = pnand %p479, %p480
      %p482 = pneg %p481
      // Predicated region
      $region9: #{tpu_custom_call.1} parent=5 // pred_check
        _
      $region10: #{tpu_custom_call.1} parent=5 // pred_check_branch
        %484 = sbr.rel (%p481) target = $region12
      $region11: #{tpu_custom_call.1} parent=5 // pred_region
        %s485 = ssub.s32 %s32, 1
        // Predicated region
        $region13: #{tpu_custom_call.1} parent=11 // pred_check
          %p486 = pneg %p70
        $region14: #{tpu_custom_call.1} parent=11 // pred_check_branch
          %488 = sbr.rel (%p486) target = $region16
        $region15: #{tpu_custom_call.1} parent=11 // pred_region
          %s489 = smul.u32 2, %s41
          %p490 = scmp.lt.s32.totalorder %s489, 1
          %s491 = scalar_select %p490, %s489, 1
          %s492 = smul.addr %s491, 8
          %s493 = scalar_lea.vmem %s0, %s492
          %s494 = smul.u32 2, %s41
        $region16: #{tpu_custom_call.1} parent=11 // pred_fallthru
          _
        // Predicated region
        $region17: #{tpu_custom_call.1} parent=11 // pred_check
          %p495 = pneg %p91
        $region18: #{tpu_custom_call.1} parent=11 // pred_check_branch
          %497 = sbr.rel (%p495) target = $region20
        $region19: #{tpu_custom_call.1} parent=11 // pred_region
          _
        $region20: #{tpu_custom_call.1} parent=11 // pred_fallthru
          _
        // Predicated region
        $region21: #{tpu_custom_call.1} parent=11 // pred_check
          %p498 = pneg %p112
        $region22: #{tpu_custom_call.1} parent=11 // pred_check_branch
          %500 = sbr.rel (%p498) target = $region24
        $region23: #{tpu_custom_call.1} parent=11 // pred_region
          _
        $region24: #{tpu_custom_call.1} parent=11 // pred_fallthru
          _
        // Predicated region
        $region25: #{tpu_custom_call.1} parent=11 // pred_check
          %p501 = pneg %p133
        $region26: #{tpu_custom_call.1} parent=11 // pred_check_branch
          %503 = sbr.rel (%p501) target = $region28
        $region27: #{tpu_custom_call.1} parent=11 // pred_region
          _
        $region28: #{tpu_custom_call.1} parent=11 // pred_fallthru
          _
      $region12: #{tpu_custom_call.1} parent=5 // pred_fallthru
        _
      %p504 = scmp.lt.s32.totalorder %s32, 2
      // Predicated region
      $region29: #{tpu_custom_call.1} parent=5 // pred_check
        %p505 = pneg %p504
      $region30: #{tpu_custom_call.1} parent=5 // pred_check_branch
        %507 = sbr.rel (%p505) target = $region32
      $region31: #{tpu_custom_call.1} parent=5 // pred_region
        // Predicated region
        $region33: #{tpu_custom_call.1} parent=31 // pred_check
          %p508 = pneg %p153
        $region34: #{tpu_custom_call.1} parent=31 // pred_check_branch
          %510 = sbr.rel (%p508) target = $region36
        $region35: #{tpu_custom_call.1} parent=31 // pred_region
          %s511 = sand.u32 %s143, 1
          %s512 = scalar_lea.sflag [#allocation4], %s511
          %s513 = sand.u32 %s143, 1
          %s514 = smul.addr %s513, 192
          %s515 = scalar_lea.vmem [#allocation3], %s514
          %s517 = ssub.s32 3072, 3072
          %518 = vsyncadd %s512, %s517
          %s519 = smul.addr %s40, 48
          %s520 = smul.addr %s519, 64
          %s521 = scalar_lea.hbm %s4, %s520
          %s522 = sshll.u32 %s515, 4
          %s523 = int_to_ptr.vmem [resolvable:$true] %s522
          %528 = dma.hbm_to_vmem [thread:$0]  %s521, 3072, %s523, %s512, 192, 192, 12
        $region36: #{tpu_custom_call.1} parent=31 // pred_fallthru
          _
        // Predicated region
        $region37: #{tpu_custom_call.1} parent=31 // pred_check
          %p529 = pneg %p179
        $region38: #{tpu_custom_call.1} parent=31 // pred_check_branch
          %531 = sbr.rel (%p529) target = $region40
        $region39: #{tpu_custom_call.1} parent=31 // pred_region
          %p532 = scmp.lt.s32.totalorder %s40, 1
          %s533 = scalar_select %p532, %s40, 1
          %s534 = smul.addr %s533, 3
          %s535 = scalar_lea.vmem %s5, %s534
        $region40: #{tpu_custom_call.1} parent=31 // pred_fallthru
          _
        // Predicated region
        $region41: #{tpu_custom_call.1} parent=31 // pred_check
          %p536 = pneg %p205
        $region42: #{tpu_custom_call.1} parent=31 // pred_check_branch
          %538 = sbr.rel (%p536) target = $region44
        $region43: #{tpu_custom_call.1} parent=31 // pred_region
          %s539 = sand.u32 %s32, 1
          %s540 = scalar_lea.sflag [#allocation7], %s539
          %s541 = sand.u32 %s195, 1
          %s542 = smul.addr %s541, 64
          %s543 = scalar_lea.vmem [#allocation6], %s542
          %s545 = ssub.s32 1024, 1024
          %546 = vsyncadd %s540, %s545
          %s547 = smul.addr %s40, 16
          %s548 = smul.addr %s547, 64
          %s549 = scalar_lea.hbm %s6, %s548
          %s550 = sshll.u32 %s543, 4
          %s551 = int_to_ptr.vmem [resolvable:$true] %s550
          %556 = dma.hbm_to_vmem [thread:$0]  %s549, 1024, %s551, %s540, 64, 64, 4
        $region44: #{tpu_custom_call.1} parent=31 // pred_fallthru
          _
        // Predicated region
        $region45: #{tpu_custom_call.1} parent=31 // pred_check
          %p557 = pneg %p231
        $region46: #{tpu_custom_call.1} parent=31 // pred_check_branch
          %559 = sbr.rel (%p557) target = $region48
        $region47: #{tpu_custom_call.1} parent=31 // pred_region
          %p560 = scmp.lt.s32.totalorder %s40, 1
          %s561 = scalar_select %p560, %s40, 1
          %s562 = scalar_lea.vmem %s7, %s561
        $region48: #{tpu_custom_call.1} parent=31 // pred_fallthru
          _
        // Predicated region
        $region49: #{tpu_custom_call.1} parent=31 // pred_check
          %p563 = pneg %p257
        $region50: #{tpu_custom_call.1} parent=31 // pred_check_branch
          %565 = sbr.rel (%p563) target = $region52
        $region51: #{tpu_custom_call.1} parent=31 // pred_region
          %p566 = scmp.lt.s32.totalorder %s40, 1
          %s567 = scalar_select %p566, %s40, 1
          %s568 = scalar_lea.vmem %s8, %s567
        $region52: #{tpu_custom_call.1} parent=31 // pred_fallthru
          _
        // Predicated region
        $region53: #{tpu_custom_call.1} parent=31 // pred_check
          %p569 = pneg %p283
        $region54: #{tpu_custom_call.1} parent=31 // pred_check_branch
          %571 = sbr.rel (%p569) target = $region56
        $region55: #{tpu_custom_call.1} parent=31 // pred_region
          %p572 = scmp.lt.s32.totalorder %s40, 1
          %s573 = scalar_select %p572, %s40, 1
          %s574 = scalar_lea.vmem %s9, %s573
        $region56: #{tpu_custom_call.1} parent=31 // pred_fallthru
          _
        // Predicated region
        $region57: #{tpu_custom_call.1} parent=31 // pred_check
          %p575 = pneg %p309
        $region58: #{tpu_custom_call.1} parent=31 // pred_check_branch
          %577 = sbr.rel (%p575) target = $region60
        $region59: #{tpu_custom_call.1} parent=31 // pred_region
          %s578 = sand.u32 %s32, 1
          %s579 = scalar_lea.sflag [#allocation7], %s578
          %s580 = sand.u32 %s299, 1
          %s581 = smul.addr %s580, 128
          %s582 = scalar_lea.vmem [#allocation8], %s581
          %s584 = ssub.s32 2048, 2048
          %585 = vsyncadd %s579, %s584
          %s586 = smul.addr %s40, 32
          %s587 = smul.addr %s586, 64
          %s588 = scalar_lea.hbm %s10, %s587
          %s589 = sshll.u32 %s582, 4
          %s590 = int_to_ptr.vmem [resolvable:$true] %s589
          %595 = dma.hbm_to_vmem [thread:$0]  %s588, 2048, %s590, %s579, 128, 128, 8
        $region60: #{tpu_custom_call.1} parent=31 // pred_fallthru
          _
        // Predicated region
        $region61: #{tpu_custom_call.1} parent=31 // pred_check
          %p596 = pneg %p335
        $region62: #{tpu_custom_call.1} parent=31 // pred_check_branch
          %598 = sbr.rel (%p596) target = $region64
        $region63: #{tpu_custom_call.1} parent=31 // pred_region
          %p599 = scmp.lt.s32.totalorder %s40, 1
          %s600 = scalar_select %p599, %s40, 1
          %s601 = smul.addr %s600, 2
          %s602 = scalar_lea.vmem %s11, %s601
        $region64: #{tpu_custom_call.1} parent=31 // pred_fallthru
          _
        // Predicated region
        $region65: #{tpu_custom_call.1} parent=31 // pred_check
          %p603 = pneg %p361
        $region66: #{tpu_custom_call.1} parent=31 // pred_check_branch
          %605 = sbr.rel (%p603) target = $region68
        $region67: #{tpu_custom_call.1} parent=31 // pred_region
          %s606 = sand.u32 %s351, 1
          %s607 = scalar_lea.sflag [#allocation10], %s606
          %s608 = sand.u32 %s351, 1
          %s609 = smul.addr %s608, 128
          %s610 = scalar_lea.vmem [#allocation9], %s609
          %s612 = ssub.s32 2048, 2048
          %613 = vsyncadd %s607, %s612
          %s614 = smul.addr %s40, 32
          %s615 = smul.addr %s614, 64
          %s616 = scalar_lea.hbm %s12, %s615
          %s617 = sshll.u32 %s610, 4
          %s618 = int_to_ptr.vmem [resolvable:$true] %s617
          %623 = dma.hbm_to_vmem [thread:$0]  %s616, 2048, %s618, %s607, 64, 64, 4
        $region68: #{tpu_custom_call.1} parent=31 // pred_fallthru
          _
        // Predicated region
        $region69: #{tpu_custom_call.1} parent=31 // pred_check
          %p624 = pneg %p387
        $region70: #{tpu_custom_call.1} parent=31 // pred_check_branch
          %626 = sbr.rel (%p624) target = $region72
        $region71: #{tpu_custom_call.1} parent=31 // pred_region
          %p627 = scmp.lt.s32.totalorder %s40, 1
          %s628 = scalar_select %p627, %s40, 1
          %s629 = scalar_lea.vmem %s13, %s628
        $region72: #{tpu_custom_call.1} parent=31 // pred_fallthru
          _
        // Predicated region
        $region73: #{tpu_custom_call.1} parent=31 // pred_check
          %p630 = pneg %p413
        $region74: #{tpu_custom_call.1} parent=31 // pred_check_branch
          %632 = sbr.rel (%p630) target = $region76
        $region75: #{tpu_custom_call.1} parent=31 // pred_region
          %p633 = scmp.lt.s32.totalorder %s40, 1
          %s634 = scalar_select %p633, %s40, 1
          %s635 = scalar_lea.vmem %s14, %s634
        $region76: #{tpu_custom_call.1} parent=31 // pred_fallthru
          _
        // Predicated region
        $region77: #{tpu_custom_call.1} parent=31 // pred_check
          %p636 = pneg %p439
        $region78: #{tpu_custom_call.1} parent=31 // pred_check_branch
          %638 = sbr.rel (%p636) target = $region80
        $region79: #{tpu_custom_call.1} parent=31 // pred_region
          %p639 = scmp.lt.s32.totalorder %s40, 1
          %s640 = scalar_select %p639, %s40, 1
          %s641 = scalar_lea.vmem %s15, %s640
        $region80: #{tpu_custom_call.1} parent=31 // pred_fallthru
          _
      $region32: #{tpu_custom_call.1} parent=5 // pred_fallthru
        _
      %p642 = scmp.le.s32.totalorder 1, %s32
      %p643 = scmp.lt.s32.totalorder %s32, 3
      %p644 = pnand %p642, %p643
      %p645 = pneg %p644
      // Predicated region
      $region81: #{tpu_custom_call.1} parent=5 // pred_check
        _
      $region82: #{tpu_custom_call.1} parent=5 // pred_check_branch
        %647 = sbr.rel (%p644) target = $region84
      $region83: #{tpu_custom_call.1} parent=5 // pred_region
        %s648 = ssub.s32 %s32, 1
        %s649 = sand.u32 %s146, 1
        %s650 = scalar_lea.sflag [#allocation4], %s649
        %s651 = sand.u32 %s146, 1
        %s652 = smul.addr %s651, 192
        %s653 = scalar_lea.vmem [#allocation3], %s652
        // Predicated region
        $region85: #{tpu_custom_call.1} parent=83 // pred_check
          %p654 = pneg %p159
        $region86: #{tpu_custom_call.1} parent=83 // pred_check_branch
          %656 = sbr.rel (%p654) target = $region88
        $region87: #{tpu_custom_call.1} parent=83 // pred_region
          %657 = dma.done %s650, 3072
        $region88: #{tpu_custom_call.1} parent=83 // pred_fallthru
          _
        %s658 = sand.u32 %s37, 1
        %s659 = scalar_lea.sflag [#allocation7], %s658
        %s660 = sand.u32 %s198, 1
        %s661 = smul.addr %s660, 64
        %s662 = scalar_lea.vmem [#allocation6], %s661
        // Predicated region
        $region89: #{tpu_custom_call.1} parent=83 // pred_check
          %p663 = pneg %p211
        $region90: #{tpu_custom_call.1} parent=83 // pred_check_branch
          %665 = sbr.rel (%p663) target = $region92
        $region91: #{tpu_custom_call.1} parent=83 // pred_region
          %666 = dma.done %s659, 1024
        $region92: #{tpu_custom_call.1} parent=83 // pred_fallthru
          _
        %s667 = sand.u32 %s37, 1
        %s668 = scalar_lea.sflag [#allocation7], %s667
        %s669 = sand.u32 %s302, 1
        %s670 = smul.addr %s669, 128
        %s671 = scalar_lea.vmem [#allocation8], %s670
        // Predicated region
        $region93: #{tpu_custom_call.1} parent=83 // pred_check
          %p672 = pneg %p315
        $region94: #{tpu_custom_call.1} parent=83 // pred_check_branch
          %674 = sbr.rel (%p672) target = $region96
        $region95: #{tpu_custom_call.1} parent=83 // pred_region
          %675 = dma.done %s668, 2048
        $region96: #{tpu_custom_call.1} parent=83 // pred_fallthru
          _
        %s676 = sand.u32 %s354, 1
        %s677 = scalar_lea.sflag [#allocation10], %s676
        %s678 = sand.u32 %s354, 1
        %s679 = smul.addr %s678, 128
        %s680 = scalar_lea.vmem [#allocation9], %s679
        // Predicated region
        $region97: #{tpu_custom_call.1} parent=83 // pred_check
          %p681 = pneg %p367
        $region98: #{tpu_custom_call.1} parent=83 // pred_check_branch
          %683 = sbr.rel (%p681) target = $region100
        $region99: #{tpu_custom_call.1} parent=83 // pred_region
          %684 = dma.done %s677, 2048
        $region100: #{tpu_custom_call.1} parent=83 // pred_fallthru
          _
        %s685 = smul.u32 2, %s41
        %p686 = scmp.lt.s32.totalorder %s685, 1
        %s687 = scalar_select %p686, %s685, 1
        %s688 = smul.addr %s687, 8
        %s689 = scalar_lea.vmem %s0, %s688
        %p690 = pneg %p70
        %p691 = pneg %p67
        %p692 = pneg %p91
        %p693 = pneg %p88
        %p694 = pneg %p112
        %p695 = pneg %p109
        %p696 = pneg %p133
        %p697 = pneg %p130
        %s698 = sand.u32 %s146, 1
        %s699 = scalar_lea.sflag [#allocation4], %s698
        %s700 = sand.u32 %s146, 1
        %s701 = smul.addr %s700, 192
        %s702 = scalar_lea.vmem [#allocation3], %s701
        %p703 = pneg %p159
        %p704 = pneg %p156
        %p705 = scmp.lt.s32.totalorder %s42, 1
        %s706 = scalar_select %p705, %s42, 1
        %s707 = smul.addr %s706, 3
        %s708 = scalar_lea.vmem %s5, %s707
        %p709 = pneg %p185
        %p710 = pneg %p182
        %s711 = sand.u32 %s37, 1
        %s712 = scalar_lea.sflag [#allocation7], %s711
        %s713 = sand.u32 %s198, 1
        %s714 = smul.addr %s713, 64
        %s715 = scalar_lea.vmem [#allocation6], %s714
        %p716 = pneg %p211
        %p717 = pneg %p208
        %p718 = scmp.lt.s32.totalorder %s42, 1
        %s719 = scalar_select %p718, %s42, 1
        %s720 = scalar_lea.vmem %s7, %s719
        %p721 = pneg %p237
        %p722 = pneg %p234
        %p723 = scmp.lt.s32.totalorder %s42, 1
        %s724 = scalar_select %p723, %s42, 1
        %s725 = scalar_lea.vmem %s8, %s724
        %p726 = pneg %p263
        %p727 = pneg %p260
        %p728 = scmp.lt.s32.totalorder %s42, 1
        %s729 = scalar_select %p728, %s42, 1
        %s730 = scalar_lea.vmem %s9, %s729
        %p731 = pneg %p289
        %p732 = pneg %p286
        %s733 = sand.u32 %s37, 1
        %s734 = scalar_lea.sflag [#allocation7], %s733
        %s735 = sand.u32 %s302, 1
        %s736 = smul.addr %s735, 128
        %s737 = scalar_lea.vmem [#allocation8], %s736
        %p738 = pneg %p315
        %p739 = pneg %p312
        %p740 = scmp.lt.s32.totalorder %s42, 1
        %s741 = scalar_select %p740, %s42, 1
        %s742 = smul.addr %s741, 2
        %s743 = scalar_lea.vmem %s11, %s742
        %p744 = pneg %p341
        %p745 = pneg %p338
        %s746 = sand.u32 %s354, 1
        %s747 = scalar_lea.sflag [#allocation10], %s746
        %s748 = sand.u32 %s354, 1
        %s749 = smul.addr %s748, 128
        %s750 = scalar_lea.vmem [#allocation9], %s749
        %p751 = pneg %p367
        %p752 = pneg %p364
        %p753 = scmp.lt.s32.totalorder %s42, 1
        %s754 = scalar_select %p753, %s42, 1
        %s755 = scalar_lea.vmem %s13, %s754
        %p756 = pneg %p393
        %p757 = pneg %p390
        %p758 = scmp.lt.s32.totalorder %s42, 1
        %s759 = scalar_select %p758, %s42, 1
        %s760 = scalar_lea.vmem %s14, %s759
        %p761 = pneg %p419
        %p762 = pneg %p416
        %p763 = scmp.lt.s32.totalorder %s42, 1
        %s764 = scalar_select %p763, %s42, 1
        %s765 = scalar_lea.vmem %s15, %s764
        %p766 = pneg %p445
        %p767 = pneg %p442
        %p768 = pneg %p471
        %p769 = pneg %p468
        %s770 = smul.u32 2, %s41
        %p771 = scmp.lt.s32.totalorder %s770, 1
        %s772 = scalar_select %p771, %s770, 1
        %s773 = smul.addr %s772, 8
        %s774 = scalar_lea.vmem %s0, %s773
        %s775 = smul.u32 2, %s41
        %p776 = scmp.lt.s32.totalorder %s42, 1
        %s777 = scalar_select %p776, %s42, 1
        %s778 = smul.addr %s777, 3
        %s779 = scalar_lea.vmem %s5, %s778
        %p780 = scmp.lt.s32.totalorder %s42, 1
        %s781 = scalar_select %p780, %s42, 1
        %s782 = scalar_lea.vmem %s7, %s781
        %p783 = scmp.lt.s32.totalorder %s42, 1
        %s784 = scalar_select %p783, %s42, 1
        %s785 = scalar_lea.vmem %s8, %s784
        %p786 = scmp.lt.s32.totalorder %s42, 1
        %s787 = scalar_select %p786, %s42, 1
        %s788 = scalar_lea.vmem %s9, %s787
        %p789 = scmp.lt.s32.totalorder %s42, 1
        %s790 = scalar_select %p789, %s42, 1
        %s791 = smul.addr %s790, 2
        %s792 = scalar_lea.vmem %s11, %s791
        %p793 = scmp.lt.s32.totalorder %s42, 1
        %s794 = scalar_select %p793, %s42, 1
        %s795 = scalar_lea.vmem %s13, %s794
        %p796 = scmp.lt.s32.totalorder %s42, 1
        %s797 = scalar_select %p796, %s42, 1
        %s798 = scalar_lea.vmem %s14, %s797
        %p799 = scmp.lt.s32.totalorder %s42, 1
        %s800 = scalar_select %p799, %s42, 1
        %s801 = scalar_lea.vmem %s15, %s800
        %s802 = smul.u32 2, %s41
        %p804 = scmp.eq.s32.totalorder %s42, 0
        // Predicated region
        $region101: #{tpu_custom_call.1} parent=83 // pred_check
          %p805 = pneg %p804
        $region102: #{tpu_custom_call.1} parent=83 // pred_check_branch
          %807 = sbr.rel (%p805) target = $region104
        $region103: #{tpu_custom_call.1} parent=83 // pred_region
          %v808 = vld [vmem:[%s774] sm:$0xff]
          %v809 = vld [vmem:[%s774 + $0x8] sm:$0xff]
          %v810 = vld [vmem:[%s1] sm:$0x1]
          %v811 = vld [vmem:[%s2] sm:$0x1]
          %812 = vadd.xlane.f32.xlu0 %v808
          %v813 = vpop.xlane.xlu0 %812
          %814 = vadd.xlane.f32.xlu0 %v809
          %v815 = vpop.xlane.xlu0 %814
          %v816 = vrcp.pop 128.0
          %v817 = vmul.f32 %v813, %v816
          %v818 = vmul.f32 %v815, %v816
          %v819 = vsub.f32 %v808, %v817
          %v820 = vsub.f32 %v809, %v818
          %v821 = vmul.f32 %v819, %v819
          %v822 = vmul.f32 %v820, %v820
          %823 = vadd.xlane.f32.xlu0 %v821
          %v824 = vpop.xlane.xlu0 %823
          %825 = vadd.xlane.f32.xlu0 %v822
          %v826 = vpop.xlane.xlu0 %825
          %v827 = vmul.f32 %v824, %v816
          %v828 = vmul.f32 %v826, %v816
          %v829 = vadd.f32 %v827, 1e-12
          %v830 = vadd.f32 %v828, 1e-12
          %v831 = vrsqrt.pop %v829
          %v832 = vrsqrt.pop %v830
          %v833 = vmul.f32 %v819, %v831
          %v834 = vmul.f32 %v820, %v832
          %v836 = vlaneseq
          %v837 = vshrl.u32 %v836, 7
          %v838 = vsub.s32 0, %v837
          %v839 = vrot.slane %v810, %v838
          %v841 = vmul.f32 %v833, %v839
          %v842 = vmul.f32 %v834, %v839
          %v844 = vlaneseq
          %v845 = vshrl.u32 %v844, 7
          %v846 = vsub.s32 0, %v845
          %v847 = vrot.slane %v811, %v846
          %v849 = vadd.f32 %v841, %v847
          %v850 = vadd.f32 %v842, %v847
          %851 = vst [vmem:[#allocation2] sm:$0xff] %v849
          %852 = vst [vmem:[#allocation2 + $0x8] sm:$0xff] %v850
        $region104: #{tpu_custom_call.1} parent=83 // pred_fallthru
          _
        %v853 = vld [vmem:[#allocation2] sm:$0xff]
        %v854 = vld [vmem:[#allocation2 + $0x8] sm:$0xff]
        %v855 = vpack.c.bf16 %v854, %v853
        %v856 = vld [vmem:[%s653] sm:$0xff]
        %v857 = vld [vmem:[%s653 + $0x8] sm:$0xf]
        %v858 = vld [vmem:[%s653 + $0xc] sm:$0xff]
        %v859 = vld [vmem:[%s653 + $0x14] sm:$0xf]
        %v860 = vld [vmem:[%s653 + $0x18] sm:$0xff]
        %v861 = vld [vmem:[%s653 + $0x20] sm:$0xf]
        %v862 = vld [vmem:[%s653 + $0x24] sm:$0xff]
        %v863 = vld [vmem:[%s653 + $0x2c] sm:$0xf]
        %v864 = vld [vmem:[%s653 + $0x30] sm:$0xff]
        %v865 = vld [vmem:[%s653 + $0x38] sm:$0xf]
        %v866 = vld [vmem:[%s653 + $0x3c] sm:$0xff]
        %v867 = vld [vmem:[%s653 + $0x44] sm:$0xf]
        %v868 = vld [vmem:[%s653 + $0x48] sm:$0xff]
        %v869 = vld [vmem:[%s653 + $0x50] sm:$0xf]
        %v870 = vld [vmem:[%s653 + $0x54] sm:$0xff]
        %v871 = vld [vmem:[%s653 + $0x5c] sm:$0xf]
        %v872 = vld [vmem:[%s653 + $0x60] sm:$0xff]
        %v873 = vld [vmem:[%s653 + $0x68] sm:$0xf]
        %v874 = vld [vmem:[%s653 + $0x6c] sm:$0xff]
        %v875 = vld [vmem:[%s653 + $0x74] sm:$0xf]
        %v876 = vld [vmem:[%s653 + $0x78] sm:$0xff]
        %v877 = vld [vmem:[%s653 + $0x80] sm:$0xf]
        %v878 = vld [vmem:[%s653 + $0x84] sm:$0xff]
        %v879 = vld [vmem:[%s653 + $0x8c] sm:$0xf]
        %v880 = vld [vmem:[%s653 + $0x90] sm:$0xff]
        %v881 = vld [vmem:[%s653 + $0x98] sm:$0xf]
        %v882 = vld [vmem:[%s653 + $0x9c] sm:$0xff]
        %v883 = vld [vmem:[%s653 + $0xa4] sm:$0xf]
        %v884 = vld [vmem:[%s653 + $0xa8] sm:$0xff]
        %v885 = vld [vmem:[%s653 + $0xb0] sm:$0xf]
        %v886 = vld [vmem:[%s653 + $0xb4] sm:$0xff]
        %v887 = vld [vmem:[%s653 + $0xbc] sm:$0xf]
        %v888 = vld [vmem:[%s779] sm:$0x7]
        %v890 = vlaneseq
        %v891 = vshrl.u32 %v890, 7
        %v892 = vsub.s32 0, %v891
        %v893 = vrot.slane %v888, %v892
        %v894 = vlaneseq
        %v895 = vshrl.u32 %v894, 7
        %v896 = vsub.s32 1, %v895
        %v897 = vrot.slane %v888, %v896
        %v898 = vlaneseq
        %v899 = vshrl.u32 %v898, 7
        %v900 = vsub.s32 2, %v899
        %v901 = vrot.slane %v888, %v900
        %v937 = vunpack.c.l.b16 %v856
        %v938 = vunpack.c.h.b16 %v856
        %v939 = vunpack.c.l.b16 %v857
        %v940 = vunpack.c.l.b16 %v858
        %v941 = vunpack.c.h.b16 %v858
        %v942 = vunpack.c.l.b16 %v859
        %v943 = vunpack.c.l.b16 %v860
        %v944 = vunpack.c.h.b16 %v860
        %v945 = vunpack.c.l.b16 %v861
        %v946 = vunpack.c.l.b16 %v862
        %v947 = vunpack.c.h.b16 %v862
        %v948 = vunpack.c.l.b16 %v863
        %v949 = vunpack.c.l.b16 %v864
        %v950 = vunpack.c.h.b16 %v864
        %v951 = vunpack.c.l.b16 %v865
        %v952 = vunpack.c.l.b16 %v866
        %v953 = vunpack.c.h.b16 %v866
        %v954 = vunpack.c.l.b16 %v867
        %v955 = vunpack.c.l.b16 %v868
        %v956 = vunpack.c.h.b16 %v868
        %v957 = vunpack.c.l.b16 %v869
        %v958 = vunpack.c.l.b16 %v870
        %v959 = vunpack.c.h.b16 %v870
        %v960 = vunpack.c.l.b16 %v871
        %v961 = vunpack.c.l.b16 %v872
        %v962 = vunpack.c.h.b16 %v872
        %v963 = vunpack.c.l.b16 %v873
        %v964 = vunpack.c.l.b16 %v874
        %v965 = vunpack.c.h.b16 %v874
        %v966 = vunpack.c.l.b16 %v875
        %v967 = vunpack.c.l.b16 %v876
        %v968 = vunpack.c.h.b16 %v876
        %v969 = vunpack.c.l.b16 %v877
        %v970 = vunpack.c.l.b16 %v878
        %v971 = vunpack.c.h.b16 %v878
        %v972 = vunpack.c.l.b16 %v879
        %v973 = vunpack.c.l.b16 %v880
        %v974 = vunpack.c.h.b16 %v880
        %v975 = vunpack.c.l.b16 %v881
        %v976 = vunpack.c.l.b16 %v882
        %v977 = vunpack.c.h.b16 %v882
        %v978 = vunpack.c.l.b16 %v883
        %v979 = vunpack.c.l.b16 %v884
        %v980 = vunpack.c.h.b16 %v884
        %v981 = vunpack.c.l.b16 %v885
        %v982 = vunpack.c.l.b16 %v886
        %v983 = vunpack.c.h.b16 %v886
        %v984 = vunpack.c.l.b16 %v887
        %v985 = vpack.c.b16 %v940, %v937
        %v986 = vpack.c.b16 %v941, %v938
        %v987 = vpack.c.b16 %v942, %v939
        %v988 = vpack.c.b16 %v946, %v943
        %v989 = vpack.c.b16 %v947, %v944
        %v990 = vpack.c.b16 %v948, %v945
        %v991 = vpack.c.b16 %v952, %v949
        %v992 = vpack.c.b16 %v953, %v950
        %v993 = vpack.c.b16 %v954, %v951
        %v994 = vpack.c.b16 %v958, %v955
        %v995 = vpack.c.b16 %v959, %v956
        %v996 = vpack.c.b16 %v960, %v957
        %v997 = vpack.c.b16 %v964, %v961
        %v998 = vpack.c.b16 %v965, %v962
        %v999 = vpack.c.b16 %v966, %v963
        %v1000 = vpack.c.b16 %v970, %v967
        %v1001 = vpack.c.b16 %v971, %v968
        %v1002 = vpack.c.b16 %v972, %v969
        %v1003 = vpack.c.b16 %v976, %v973
        %v1004 = vpack.c.b16 %v977, %v974
        %v1005 = vpack.c.b16 %v978, %v975
        %v1006 = vpack.c.b16 %v982, %v979
        %v1007 = vpack.c.b16 %v983, %v980
        %v1008 = vpack.c.b16 %v984, %v981
        %1033 = vmatprep.subr.bf16.mxu0 %v986
        %1034 = vmatpush1.bf16.msra.mxu0 %v985
        %1035 = vmatprep.subr.bf16.mxu0 %v989
        %1036 = vmatpush1.bf16.msra.mxu0 %v988
        %1037 = vmatprep.subr.bf16.mxu0 %v992
        %1038 = vmatpush1.bf16.msra.mxu0 %v991
        %1039 = vmatprep.subr.bf16.mxu0 %v995
        %1040 = vmatpush1.bf16.msra.mxu0 %v994
        %1041 = vmatprep.subr.bf16.mxu0 %v998
        %1042 = vmatpush1.bf16.msra.mxu0 %v997
        %1043 = vmatprep.subr.bf16.mxu0 %v1001
        %1044 = vmatpush1.bf16.msra.mxu0 %v1000
        %1045 = vmatprep.subr.bf16.mxu0 %v1004
        %1046 = vmatpush1.bf16.msra.mxu0 %v1003
        %1047 = vmatprep.subr.bf16.mxu0 %v1007
        %1048 = vmatpush1.bf16.msra.mxu0 %v1006
        %1049 = vmatprep.subr.bf16.mxu0 0
        %1050 = vmatpush1.bf16.msra.mxu0 0
        %1051 = vmatprep.subr.bf16.mxu0 0
        %1052 = vmatpush1.bf16.msra.mxu0 0
        %1053 = vmatprep.subr.bf16.mxu0 0
        %1054 = vmatpush1.bf16.msra.mxu0 0
        %1055 = vmatprep.subr.bf16.mxu0 0
        %1056 = vmatpush1.bf16.msra.mxu0 0
        %1057 = vmatprep.subr.bf16.mxu0 0
        %1058 = vmatpush1.bf16.msra.mxu0 0
        %1059 = vmatprep.subr.bf16.mxu0 0
        %1060 = vmatpush1.bf16.msra.mxu0 0
        %1061 = vmatprep.subr.bf16.mxu0 0
        %1062 = vmatpush1.bf16.msra.mxu0 0
        %1063 = vmatprep.subr.bf16.mxu0 0
        %1064 = vmatpush1.bf16.msra.mxu0 0
        %1065 = vmatprep.mubr.bf16.mxu0 0
        %1066 = vmatmul.mubr.bf16.gmra.mrb[0].mxu0 %v855
        %v1067 = vpop.f32.mrb[0].mxu0
        %v1068 = vadd.f32 %v893, %v1067
        %v1069 = vpop.f32.mrb[0].mxu0
        %v1070 = vadd.f32 %v897, %v1069
        %v1071 = vpop.f32.mrb[0].mxu0
        %v1072 = vadd.f32 %v893, %v1071
        %v1073 = vpop.f32.mrb[0].mxu0
        %v1074 = vadd.f32 %v897, %v1073
        %1075 = vdwg.mxu0
        %1076 = vmatprep.subr.bf16.mxu0 0
        %1077 = vmatpush1.bf16.msra.mxu0 %v987
        %1078 = vmatprep.subr.bf16.mxu0 0
        %1079 = vmatpush1.bf16.msra.mxu0 %v990
        %1080 = vmatprep.subr.bf16.mxu0 0
        %1081 = vmatpush1.bf16.msra.mxu0 %v993
        %1082 = vmatprep.subr.bf16.mxu0 0
        %1083 = vmatpush1.bf16.msra.mxu0 %v996
        %1084 = vmatprep.subr.bf16.mxu0 0
        %1085 = vmatpush1.bf16.msra.mxu0 %v999
        %1086 = vmatprep.subr.bf16.mxu0 0
        %1087 = vmatpush1.bf16.msra.mxu0 %v1002
        %1088 = vmatprep.subr.bf16.mxu0 0
        %1089 = vmatpush1.bf16.msra.mxu0 %v1005
        %1090 = vmatprep.subr.bf16.mxu0 0
        %1091 = vmatpush1.bf16.msra.mxu0 %v1008
        %1092 = vmatprep.subr.bf16.mxu0 0
        %1093 = vmatpush1.bf16.msra.mxu0 0
        %1094 = vmatprep.subr.bf16.mxu0 0
        %1095 = vmatpush1.bf16.msra.mxu0 0
        %1096 = vmatprep.subr.bf16.mxu0 0
        %1097 = vmatpush1.bf16.msra.mxu0 0
        %1098 = vmatprep.subr.bf16.mxu0 0
        %1099 = vmatpush1.bf16.msra.mxu0 0
        %1100 = vmatprep.subr.bf16.mxu0 0
        %1101 = vmatpush1.bf16.msra.mxu0 0
        %1102 = vmatprep.subr.bf16.mxu0 0
        %1103 = vmatpush1.bf16.msra.mxu0 0
        %1104 = vmatprep.subr.bf16.mxu0 0
        %1105 = vmatpush1.bf16.msra.mxu0 0
        %1106 = vmatprep.subr.bf16.mxu0 0
        %1107 = vmatpush1.bf16.msra.mxu0 0
        %1108 = vmatprep.mubr.bf16.mxu0 0
        %1109 = vmatmul.mubr.bf16.gmra.mrb[0].mxu0 %v855
        %v1110 = vpop.f32.mrb[0].mxu0
        %v1111 = vadd.f32 %v901, %v1110
        %v1112 = vpop.f32.mrb[0].mxu0
        %v1113 = vpop.f32.mrb[0].mxu0
        %v1114 = vadd.f32 %v901, %v1113
        %v1115 = vpop.f32.mrb[0].mxu0
        %1116 = vdwg.mxu0
        %v1117 = vmul.f32 %v1068, 0.17677669
        %v1118 = vmul.f32 %v1072, 0.17677669
        %v1119 = vpack.c.bf16 %v1118, %v1117
        %v1120 = vpack.c.bf16 %v1074, %v1070
        %v1121 = vpack.c.bf16 %v1114, %v1111
        %vm1122 = vcmask 261120
        %v1124 = vsel %vm1122, %v1119, 0
        %v1127 = vsel %vm1122, %v1120, 0
        %1129 = vmatprep.subr.bf16.mxu0 0
        %1130 = vmatpush1.bf16.xpose.msra.mxu0 %v1127
        %1131 = vmatprep.subr.bf16.mxu0 0
        %1132 = vmatpush1.bf16.xpose.msra.mxu0 0
        %1133 = vmatprep.subr.bf16.mxu0 0
        %1134 = vmatpush1.bf16.xpose.msra.mxu0 0
        %1135 = vmatprep.subr.bf16.mxu0 0
        %1136 = vmatpush1.bf16.xpose.msra.mxu0 0
        %1137 = vmatprep.subr.bf16.mxu0 0
        %1138 = vmatpush1.bf16.xpose.msra.mxu0 0
        %1139 = vmatprep.subr.bf16.mxu0 0
        %1140 = vmatpush1.bf16.xpose.msra.mxu0 0
        %1141 = vmatprep.subr.bf16.mxu0 0
        %1142 = vmatpush1.bf16.xpose.msra.mxu0 0
        %1143 = vmatprep.subr.bf16.mxu0 0
        %1144 = vmatpush1.bf16.xpose.msra.mxu0 0
        %1145 = vmatprep.subr.bf16.mxu0 0
        %1146 = vmatpush1.bf16.xpose.msra.mxu0 0
        %1147 = vmatprep.subr.bf16.mxu0 0
        %1148 = vmatpush1.bf16.xpose.msra.mxu0 0
        %1149 = vmatprep.subr.bf16.mxu0 0
        %1150 = vmatpush1.bf16.xpose.msra.mxu0 0
        %1151 = vmatprep.subr.bf16.mxu0 0
        %1152 = vmatpush1.bf16.xpose.msra.mxu0 0
        %1153 = vmatprep.subr.bf16.mxu0 0
        %1154 = vmatpush1.bf16.xpose.msra.mxu0 0
        %1155 = vmatprep.subr.bf16.mxu0 0
        %1156 = vmatpush1.bf16.xpose.msra.mxu0 0
        %1157 = vmatprep.subr.bf16.mxu0 0
        %1158 = vmatpush1.bf16.xpose.msra.mxu0 0
        %1159 = vmatprep.subr.bf16.mxu0 0
        %1160 = vmatpush1.bf16.xpose.msra.mxu0 0
        %1161 = vmatprep.mubr.bf16.mxu0 0
        %1162 = vmatmul.mubr.bf16.gmra.mrb[0].mxu0 %v1124
        %v1163 = vpop.f32.mrb[0].mxu0
        %v1164 = vadd.f32 0.0, %v1163
        %v1165 = vpop.f32.mrb[0].mxu0
        %v1166 = vpop.f32.mrb[0].mxu0
        %v1167 = vadd.f32 0.0, %v1166
        %v1168 = vpop.f32.mrb[0].mxu0
        %1169 = vdwg.mxu0
        %1171 = vrot.lane.b32.xlu0 %v1119, 96
        %v1172 = vpop.permute.xlu0 %1171
        %1174 = vrot.lane.b32.xlu0 %v1120, 96
        %v1175 = vpop.permute.xlu0 %1174
        %v1177 = vsel %vm1122, %v1172, 0
        %v1180 = vsel %vm1122, %v1175, 0
        %1182 = vmatprep.subr.bf16.mxu0 0
        %1183 = vmatpush1.bf16.xpose.msra.mxu0 %v1180
        %1184 = vmatprep.subr.bf16.mxu0 0
        %1185 = vmatpush1.bf16.xpose.msra.mxu0 0
        %1186 = vmatprep.subr.bf16.mxu0 0
        %1187 = vmatpush1.bf16.xpose.msra.mxu0 0
        %1188 = vmatprep.subr.bf16.mxu0 0
        %1189 = vmatpush1.bf16.xpose.msra.mxu0 0
        %1190 = vmatprep.subr.bf16.mxu0 0
        %1191 = vmatpush1.bf16.xpose.msra.mxu0 0
        %1192 = vmatprep.subr.bf16.mxu0 0
        %1193 = vmatpush1.bf16.xpose.msra.mxu0 0
        %1194 = vmatprep.subr.bf16.mxu0 0
        %1195 = vmatpush1.bf16.xpose.msra.mxu0 0
        %1196 = vmatprep.subr.bf16.mxu0 0
        %1197 = vmatpush1.bf16.xpose.msra.mxu0 0
        %1198 = vmatprep.subr.bf16.mxu0 0
        %1199 = vmatpush1.bf16.xpose.msra.mxu0 0
        %1200 = vmatprep.subr.bf16.mxu0 0
        %1201 = vmatpush1.bf16.xpose.msra.mxu0 0
        %1202 = vmatprep.subr.bf16.mxu0 0
        %1203 = vmatpush1.bf16.xpose.msra.mxu0 0
        %1204 = vmatprep.subr.bf16.mxu0 0
        %1205 = vmatpush1.bf16.xpose.msra.mxu0 0
        %1206 = vmatprep.subr.bf16.mxu0 0
        %1207 = vmatpush1.bf16.xpose.msra.mxu0 0
        %1208 = vmatprep.subr.bf16.mxu0 0
        %1209 = vmatpush1.bf16.xpose.msra.mxu0 0
        %1210 = vmatprep.subr.bf16.mxu0 0
        %1211 = vmatpush1.bf16.xpose.msra.mxu0 0
        %1212 = vmatprep.subr.bf16.mxu0 0
        %1213 = vmatpush1.bf16.xpose.msra.mxu0 0
        %1214 = vmatprep.mubr.bf16.mxu0 0
        %1215 = vmatmul.mubr.bf16.gmra.mrb[0].mxu0 %v1177
        %v1216 = vpop.f32.mrb[0].mxu0
        %v1217 = vadd.f32 0.0, %v1216
        %v1218 = vpop.f32.mrb[0].mxu0
        %v1219 = vpop.f32.mrb[0].mxu0
        %v1220 = vadd.f32 0.0, %v1219
        %v1221 = vpop.f32.mrb[0].mxu0
        %1222 = vdwg.mxu0
        %1223 = vrot.lane.b32.xlu0 %v1119, 64
        %v1224 = vpop.permute.xlu0 %1223
        %1225 = vrot.lane.b32.xlu0 %v1120, 64
        %v1226 = vpop.permute.xlu0 %1225
        %v1228 = vsel %vm1122, %v1224, 0
        %v1231 = vsel %vm1122, %v1226, 0
        %1233 = vmatprep.subr.bf16.mxu0 0
        %1234 = vmatpush1.bf16.xpose.msra.mxu0 %v1231
        %1235 = vmatprep.subr.bf16.mxu0 0
        %1236 = vmatpush1.bf16.xpose.msra.mxu0 0
        %1237 = vmatprep.subr.bf16.mxu0 0
        %1238 = vmatpush1.bf16.xpose.msra.mxu0 0
        %1239 = vmatprep.subr.bf16.mxu0 0
        %1240 = vmatpush1.bf16.xpose.msra.mxu0 0
        %1241 = vmatprep.subr.bf16.mxu0 0
        %1242 = vmatpush1.bf16.xpose.msra.mxu0 0
        %1243 = vmatprep.subr.bf16.mxu0 0
        %1244 = vmatpush1.bf16.xpose.msra.mxu0 0
        %1245 = vmatprep.subr.bf16.mxu0 0
        %1246 = vmatpush1.bf16.xpose.msra.mxu0 0
        %1247 = vmatprep.subr.bf16.mxu0 0
        %1248 = vmatpush1.bf16.xpose.msra.mxu0 0
        %1249 = vmatprep.subr.bf16.mxu0 0
        %1250 = vmatpush1.bf16.xpose.msra.mxu0 0
        %1251 = vmatprep.subr.bf16.mxu0 0
        %1252 = vmatpush1.bf16.xpose.msra.mxu0 0
        %1253 = vmatprep.subr.bf16.mxu0 0
        %1254 = vmatpush1.bf16.xpose.msra.mxu0 0
        %1255 = vmatprep.subr.bf16.mxu0 0
        %1256 = vmatpush1.bf16.xpose.msra.mxu0 0
        %1257 = vmatprep.subr.bf16.mxu0 0
        %1258 = vmatpush1.bf16.xpose.msra.mxu0 0
        %1259 = vmatprep.subr.bf16.mxu0 0
        %1260 = vmatpush1.bf16.xpose.msra.mxu0 0
        %1261 = vmatprep.subr.bf16.mxu0 0
        %1262 = vmatpush1.bf16.xpose.msra.mxu0 0
        %1263 = vmatprep.subr.bf16.mxu0 0
        %1264 = vmatpush1.bf16.xpose.msra.mxu0 0
        %1265 = vmatprep.mubr.bf16.mxu0 0
        %1266 = vmatmul.mubr.bf16.gmra.mrb[0].mxu0 %v1228
        %v1267 = vpop.f32.mrb[0].mxu0
        %v1268 = vadd.f32 0.0, %v1267
        %v1269 = vpop.f32.mrb[0].mxu0
        %v1270 = vpop.f32.mrb[0].mxu0
        %v1271 = vadd.f32 0.0, %v1270
        %v1272 = vpop.f32.mrb[0].mxu0
        %1273 = vdwg.mxu0
        %1274 = vrot.lane.b32.xlu0 %v1119, 32
        %v1275 = vpop.permute.xlu0 %1274
        %1276 = vrot.lane.b32.xlu0 %v1120, 32
        %v1277 = vpop.permute.xlu0 %1276
        %v1279 = vsel %vm1122, %v1275, 0
        %v1282 = vsel %vm1122, %v1277, 0
        %1284 = vmatprep.subr.bf16.mxu0 0
        %1285 = vmatpush1.bf16.xpose.msra.mxu0 %v1282
        %1286 = vmatprep.subr.bf16.mxu0 0
        %1287 = vmatpush1.bf16.xpose.msra.mxu0 0
        %1288 = vmatprep.subr.bf16.mxu0 0
        %1289 = vmatpush1.bf16.xpose.msra.mxu0 0
        %1290 = vmatprep.subr.bf16.mxu0 0
        %1291 = vmatpush1.bf16.xpose.msra.mxu0 0
        %1292 = vmatprep.subr.bf16.mxu0 0
        %1293 = vmatpush1.bf16.xpose.msra.mxu0 0
        %1294 = vmatprep.subr.bf16.mxu0 0
        %1295 = vmatpush1.bf16.xpose.msra.mxu0 0
        %1296 = vmatprep.subr.bf16.mxu0 0
        %1297 = vmatpush1.bf16.xpose.msra.mxu0 0
        %1298 = vmatprep.subr.bf16.mxu0 0
        %1299 = vmatpush1.bf16.xpose.msra.mxu0 0
        %1300 = vmatprep.subr.bf16.mxu0 0
        %1301 = vmatpush1.bf16.xpose.msra.mxu0 0
        %1302 = vmatprep.subr.bf16.mxu0 0
        %1303 = vmatpush1.bf16.xpose.msra.mxu0 0
        %1304 = vmatprep.subr.bf16.mxu0 0
        %1305 = vmatpush1.bf16.xpose.msra.mxu0 0
        %1306 = vmatprep.subr.bf16.mxu0 0
        %1307 = vmatpush1.bf16.xpose.msra.mxu0 0
        %1308 = vmatprep.subr.bf16.mxu0 0
        %1309 = vmatpush1.bf16.xpose.msra.mxu0 0
        %1310 = vmatprep.subr.bf16.mxu0 0
        %1311 = vmatpush1.bf16.xpose.msra.mxu0 0
        %1312 = vmatprep.subr.bf16.mxu0 0
        %1313 = vmatpush1.bf16.xpose.msra.mxu0 0
        %1314 = vmatprep.subr.bf16.mxu0 0
        %1315 = vmatpush1.bf16.xpose.msra.mxu0 0
        %1316 = vmatprep.mubr.bf16.mxu0 0
        %1317 = vmatmul.mubr.bf16.gmra.mrb[0].mxu0 %v1279
        %v1318 = vpop.f32.mrb[0].mxu0
        %v1319 = vadd.f32 0.0, %v1318
        %v1320 = vpop.f32.mrb[0].mxu0
        %v1321 = vpop.f32.mrb[0].mxu0
        %v1322 = vadd.f32 0.0, %v1321
        %v1323 = vpop.f32.mrb[0].mxu0
        %1324 = vdwg.mxu0
        %v1325 = vld [vmem:[%s3] sm:$0xff]
        %v1326 = vld [vmem:[%s3 + $0x8] sm:$0xff]
        %v1327 = vld [vmem:[%s3 + $0x10] sm:$0xff]
        %v1328 = vld [vmem:[%s3 + $0x18] sm:$0xff]
        %v1329 = vld [vmem:[%s3 + $0x20] sm:$0xff]
        %v1330 = vld [vmem:[%s3 + $0x28] sm:$0xff]
        %v1331 = vld [vmem:[%s3 + $0x30] sm:$0xff]
        %v1332 = vld [vmem:[%s3 + $0x38] sm:$0xff]
        %v1333 = vadd.f32 %v1164, %v1325
        %v1334 = vadd.f32 %v1167, %v1326
        %v1335 = vadd.f32 %v1217, %v1327
        %v1336 = vadd.f32 %v1220, %v1328
        %v1337 = vadd.f32 %v1268, %v1329
        %v1338 = vadd.f32 %v1271, %v1330
        %v1339 = vadd.f32 %v1319, %v1331
        %v1340 = vadd.f32 %v1322, %v1332
        %vm1341 = vcmask 130048
        %v1342 = vsel %vm1341, %v1333, -inf
        %1343 = vmax.xlane.f32.xlu0 %v1342
        %v1344 = vpop.xlane.xlu0 %1343
        %v1345 = vsel %vm1341, %v1334, -inf
        %1346 = vmax.xlane.f32.xlu0 %v1345
        %v1347 = vpop.xlane.xlu0 %1346
        %v1348 = vsel %vm1341, %v1335, -inf
        %1349 = vmax.xlane.f32.xlu0 %v1348
        %v1350 = vpop.xlane.xlu0 %1349
        %v1351 = vsel %vm1341, %v1336, -inf
        %1352 = vmax.xlane.f32.xlu0 %v1351
        %v1353 = vpop.xlane.xlu0 %1352
        %v1354 = vsel %vm1341, %v1337, -inf
        %1355 = vmax.xlane.f32.xlu0 %v1354
        %v1356 = vpop.xlane.xlu0 %1355
        %v1357 = vsel %vm1341, %v1338, -inf
        %1358 = vmax.xlane.f32.xlu0 %v1357
        %v1359 = vpop.xlane.xlu0 %1358
        %v1360 = vsel %vm1341, %v1339, -inf
        %1361 = vmax.xlane.f32.xlu0 %v1360
        %v1362 = vpop.xlane.xlu0 %1361
        %v1363 = vsel %vm1341, %v1340, -inf
        %1364 = vmax.xlane.f32.xlu0 %v1363
        %v1365 = vpop.xlane.xlu0 %1364
        %v1366 = vsub.f32 %v1333, %v1344
        %v1367 = vsub.f32 %v1334, %v1347
        %v1368 = vsub.f32 %v1335, %v1350
        %v1369 = vsub.f32 %v1336, %v1353
        %v1370 = vsub.f32 %v1337, %v1356
        %v1371 = vsub.f32 %v1338, %v1359
        %v1372 = vsub.f32 %v1339, %v1362
        %v1373 = vsub.f32 %v1340, %v1365
        %v1374 = vmul.f32 %v1366, 1.442695
        %v1375 = vpow.pop %v1374
        %v1376 = vmul.f32 %v1367, 1.442695
        %v1377 = vpow.pop %v1376
        %v1378 = vmul.f32 %v1368, 1.442695
        %v1379 = vpow.pop %v1378
        %v1380 = vmul.f32 %v1369, 1.442695
        %v1381 = vpow.pop %v1380
        %v1382 = vmul.f32 %v1370, 1.442695
        %v1383 = vpow.pop %v1382
        %v1384 = vmul.f32 %v1371, 1.442695
        %v1385 = vpow.pop %v1384
        %v1386 = vmul.f32 %v1372, 1.442695
        %v1387 = vpow.pop %v1386
        %v1388 = vmul.f32 %v1373, 1.442695
        %v1389 = vpow.pop %v1388
        %v1390 = vsel %vm1341, %v1375, 0.0
        %1391 = vadd.xlane.f32.xlu0 %v1390
        %v1392 = vpop.xlane.xlu0 %1391
        %v1393 = vsel %vm1341, %v1377, 0.0
        %1394 = vadd.xlane.f32.xlu0 %v1393
        %v1395 = vpop.xlane.xlu0 %1394
        %v1396 = vsel %vm1341, %v1379, 0.0
        %1397 = vadd.xlane.f32.xlu0 %v1396
        %v1398 = vpop.xlane.xlu0 %1397
        %v1399 = vsel %vm1341, %v1381, 0.0
        %1400 = vadd.xlane.f32.xlu0 %v1399
        %v1401 = vpop.xlane.xlu0 %1400
        %v1402 = vsel %vm1341, %v1383, 0.0
        %1403 = vadd.xlane.f32.xlu0 %v1402
        %v1404 = vpop.xlane.xlu0 %1403
        %v1405 = vsel %vm1341, %v1385, 0.0
        %1406 = vadd.xlane.f32.xlu0 %v1405
        %v1407 = vpop.xlane.xlu0 %1406
        %v1408 = vsel %vm1341, %v1387, 0.0
        %1409 = vadd.xlane.f32.xlu0 %v1408
        %v1410 = vpop.xlane.xlu0 %1409
        %v1411 = vsel %vm1341, %v1389, 0.0
        %1412 = vadd.xlane.f32.xlu0 %v1411
        %v1413 = vpop.xlane.xlu0 %1412
        %v1414 = vrcp.pop %v1392
        %v1415 = vrcp.pop %v1395
        %v1416 = vrcp.pop %v1398
        %v1417 = vrcp.pop %v1401
        %v1418 = vrcp.pop %v1404
        %v1419 = vrcp.pop %v1407
        %v1420 = vrcp.pop %v1410
        %v1421 = vrcp.pop %v1413
        %v1422 = vmul.f32 %v1375, %v1414
        %v1423 = vmul.f32 %v1377, %v1415
        %v1424 = vmul.f32 %v1379, %v1416
        %v1425 = vmul.f32 %v1381, %v1417
        %v1426 = vmul.f32 %v1383, %v1418
        %v1427 = vmul.f32 %v1385, %v1419
        %v1428 = vmul.f32 %v1387, %v1420
        %v1429 = vmul.f32 %v1389, %v1421
        %v1430 = vpack.c.bf16 %v1423, %v1422
        %v1431 = vpack.c.bf16 %v1425, %v1424
        %v1432 = vpack.c.bf16 %v1427, %v1426
        %v1433 = vpack.c.bf16 %v1429, %v1428
        %v1434 = vld [vmem:[%s662] sm:$0xf]
        %v1435 = vld [vmem:[%s662 + $0x4] sm:$0xf]
        %v1436 = vld [vmem:[%s662 + $0x8] sm:$0xf]
        %v1437 = vld [vmem:[%s662 + $0xc] sm:$0xf]
        %v1438 = vld [vmem:[%s662 + $0x10] sm:$0xf]
        %v1439 = vld [vmem:[%s662 + $0x14] sm:$0xf]
        %v1440 = vld [vmem:[%s662 + $0x18] sm:$0xf]
        %v1441 = vld [vmem:[%s662 + $0x1c] sm:$0xf]
        %v1442 = vld [vmem:[%s662 + $0x20] sm:$0xf]
        %v1443 = vld [vmem:[%s662 + $0x24] sm:$0xf]
        %v1444 = vld [vmem:[%s662 + $0x28] sm:$0xf]
        %v1445 = vld [vmem:[%s662 + $0x2c] sm:$0xf]
        %v1446 = vld [vmem:[%s662 + $0x30] sm:$0xf]
        %v1447 = vld [vmem:[%s662 + $0x34] sm:$0xf]
        %v1448 = vld [vmem:[%s662 + $0x38] sm:$0xf]
        %v1449 = vld [vmem:[%s662 + $0x3c] sm:$0xf]
        %v1450 = vld [vmem:[%s782] sm:$0x1]
        %v1452 = vsel %vm1341, %v1430, 0
        %1454 = vmatprep.subr.bf16.mxu0 0
        %1455 = vmatpush1.bf16.msra.mxu0 %v1121
        %1456 = vmatprep.subr.bf16.mxu0 0
        %1457 = vmatpush1.bf16.msra.mxu0 0
        %1458 = vmatprep.subr.bf16.mxu0 0
        %1459 = vmatpush1.bf16.msra.mxu0 0
        %1460 = vmatprep.subr.bf16.mxu0 0
        %1461 = vmatpush1.bf16.msra.mxu0 0
        %1462 = vmatprep.subr.bf16.mxu0 0
        %1463 = vmatpush1.bf16.msra.mxu0 0
        %1464 = vmatprep.subr.bf16.mxu0 0
        %1465 = vmatpush1.bf16.msra.mxu0 0
        %1466 = vmatprep.subr.bf16.mxu0 0
        %1467 = vmatpush1.bf16.msra.mxu0 0
        %1468 = vmatprep.subr.bf16.mxu0 0
        %1469 = vmatpush1.bf16.msra.mxu0 0
        %1470 = vmatprep.subr.bf16.mxu0 0
        %1471 = vmatpush1.bf16.msra.mxu0 0
        %1472 = vmatprep.subr.bf16.mxu0 0
        %1473 = vmatpush1.bf16.msra.mxu0 0
        %1474 = vmatprep.subr.bf16.mxu0 0
        %1475 = vmatpush1.bf16.msra.mxu0 0
        %1476 = vmatprep.subr.bf16.mxu0 0
        %1477 = vmatpush1.bf16.msra.mxu0 0
        %1478 = vmatprep.subr.bf16.mxu0 0
        %1479 = vmatpush1.bf16.msra.mxu0 0
        %1480 = vmatprep.subr.bf16.mxu0 0
        %1481 = vmatpush1.bf16.msra.mxu0 0
        %1482 = vmatprep.subr.bf16.mxu0 0
        %1483 = vmatpush1.bf16.msra.mxu0 0
        %1484 = vmatprep.subr.bf16.mxu0 0
        %1485 = vmatpush1.bf16.msra.mxu0 0
        %1486 = vmatprep.mubr.bf16.mxu0 0
        %1487 = vmatmul.mubr.bf16.gmra.mrb[0].mxu0 %v1452
        %v1488 = vpop.f32.mrb[0].mxu0
        %v1489 = vadd.f32 0.0, %v1488
        %v1490 = vpop.f32.mrb[0].mxu0
        %v1491 = vpop.f32.mrb[0].mxu0
        %v1492 = vadd.f32 0.0, %v1491
        %v1493 = vpop.f32.mrb[0].mxu0
        %1494 = vdwg.mxu0
        %v1495 = vpack.c.bf16 %v1492, %v1489
        %v1500 = vunpack.c.l.b16 %v1434
        %v1501 = vunpack.c.l.b16 %v1435
        %v1502 = vunpack.c.l.b16 %v1436
        %v1503 = vunpack.c.l.b16 %v1437
        %v1504 = vpack.c.b16 %v1501, %v1500
        %v1505 = vpack.c.b16 %v1503, %v1502
        %v1509 = vsel %vm1122, %v1495, 0
        %1511 = vmatprep.subr.bf16.mxu0 0
        %1512 = vmatpush1.bf16.msra.mxu0 %v1504
        %1513 = vmatprep.subr.bf16.mxu0 0
        %1514 = vmatpush1.bf16.msra.mxu0 %v1505
        %1515 = vmatprep.subr.bf16.mxu0 0
        %1516 = vmatpush1.bf16.msra.mxu0 0
        %1517 = vmatprep.subr.bf16.mxu0 0
        %1518 = vmatpush1.bf16.msra.mxu0 0
        %1519 = vmatprep.subr.bf16.mxu0 0
        %1520 = vmatpush1.bf16.msra.mxu0 0
        %1521 = vmatprep.subr.bf16.mxu0 0
        %1522 = vmatpush1.bf16.msra.mxu0 0
        %1523 = vmatprep.subr.bf16.mxu0 0
        %1524 = vmatpush1.bf16.msra.mxu0 0
        %1525 = vmatprep.subr.bf16.mxu0 0
        %1526 = vmatpush1.bf16.msra.mxu0 0
        %1527 = vmatprep.subr.bf16.mxu0 0
        %1528 = vmatpush1.bf16.msra.mxu0 0
        %1529 = vmatprep.subr.bf16.mxu0 0
        %1530 = vmatpush1.bf16.msra.mxu0 0
        %1531 = vmatprep.subr.bf16.mxu0 0
        %1532 = vmatpush1.bf16.msra.mxu0 0
        %1533 = vmatprep.subr.bf16.mxu0 0
        %1534 = vmatpush1.bf16.msra.mxu0 0
        %1535 = vmatprep.subr.bf16.mxu0 0
        %1536 = vmatpush1.bf16.msra.mxu0 0
        %1537 = vmatprep.subr.bf16.mxu0 0
        %1538 = vmatpush1.bf16.msra.mxu0 0
        %1539 = vmatprep.subr.bf16.mxu0 0
        %1540 = vmatpush1.bf16.msra.mxu0 0
        %1541 = vmatprep.subr.bf16.mxu0 0
        %1542 = vmatpush1.bf16.msra.mxu0 0
        %1543 = vmatprep.mubr.bf16.mxu0 0
        %1544 = vmatmul.mubr.bf16.gmra.mrb[0].mxu0 %v1509
        %v1545 = vpop.f32.mrb[0].mxu0
        %v1546 = vadd.f32 0.0, %v1545
        %v1547 = vpop.f32.mrb[0].mxu0
        %v1548 = vpop.f32.mrb[0].mxu0
        %v1549 = vadd.f32 0.0, %v1548
        %v1550 = vpop.f32.mrb[0].mxu0
        %1551 = vdwg.mxu0
        %v1553 = vlaneseq
        %v1554 = vshrl.u32 %v1553, 7
        %v1555 = vsub.s32 0, %v1554
        %v1556 = vrot.slane %v1450, %v1555
        %v1558 = vadd.f32 %v1556, %v1546
        %v1559 = vadd.f32 %v1556, %v1549
        %1561 = vrot.lane.b32.xlu0 %v1121, 96
        %v1562 = vpop.permute.xlu0 %1561
        %v1565 = vsel %vm1341, %v1431, 0
        %1567 = vmatprep.subr.bf16.mxu0 0
        %1568 = vmatpush1.bf16.msra.mxu0 %v1562
        %1569 = vmatprep.subr.bf16.mxu0 0
        %1570 = vmatpush1.bf16.msra.mxu0 0
        %1571 = vmatprep.subr.bf16.mxu0 0
        %1572 = vmatpush1.bf16.msra.mxu0 0
        %1573 = vmatprep.subr.bf16.mxu0 0
        %1574 = vmatpush1.bf16.msra.mxu0 0
        %1575 = vmatprep.subr.bf16.mxu0 0
        %1576 = vmatpush1.bf16.msra.mxu0 0
        %1577 = vmatprep.subr.bf16.mxu0 0
        %1578 = vmatpush1.bf16.msra.mxu0 0
        %1579 = vmatprep.subr.bf16.mxu0 0
        %1580 = vmatpush1.bf16.msra.mxu0 0
        %1581 = vmatprep.subr.bf16.mxu0 0
        %1582 = vmatpush1.bf16.msra.mxu0 0
        %1583 = vmatprep.subr.bf16.mxu0 0
        %1584 = vmatpush1.bf16.msra.mxu0 0
        %1585 = vmatprep.subr.bf16.mxu0 0
        %1586 = vmatpush1.bf16.msra.mxu0 0
        %1587 = vmatprep.subr.bf16.mxu0 0
        %1588 = vmatpush1.bf16.msra.mxu0 0
        %1589 = vmatprep.subr.bf16.mxu0 0
        %1590 = vmatpush1.bf16.msra.mxu0 0
        %1591 = vmatprep.subr.bf16.mxu0 0
        %1592 = vmatpush1.bf16.msra.mxu0 0
        %1593 = vmatprep.subr.bf16.mxu0 0
        %1594 = vmatpush1.bf16.msra.mxu0 0
        %1595 = vmatprep.subr.bf16.mxu0 0
        %1596 = vmatpush1.bf16.msra.mxu0 0
        %1597 = vmatprep.subr.bf16.mxu0 0
        %1598 = vmatpush1.bf16.msra.mxu0 0
        %1599 = vmatprep.mubr.bf16.mxu0 0
        %1600 = vmatmul.mubr.bf16.gmra.mrb[0].mxu0 %v1565
        %v1601 = vpop.f32.mrb[0].mxu0
        %v1602 = vadd.f32 0.0, %v1601
        %v1603 = vpop.f32.mrb[0].mxu0
        %v1604 = vpop.f32.mrb[0].mxu0
        %v1605 = vadd.f32 0.0, %v1604
        %v1606 = vpop.f32.mrb[0].mxu0
        %1607 = vdwg.mxu0
        %v1608 = vpack.c.bf16 %v1605, %v1602
        %v1613 = vunpack.c.l.b16 %v1438
        %v1614 = vunpack.c.l.b16 %v1439
        %v1615 = vunpack.c.l.b16 %v1440
        %v1616 = vunpack.c.l.b16 %v1441
        %v1617 = vpack.c.b16 %v1614, %v1613
        %v1618 = vpack.c.b16 %v1616, %v1615
        %v1622 = vsel %vm1122, %v1608, 0
        %1624 = vmatprep.subr.bf16.mxu0 0
        %1625 = vmatpush1.bf16.msra.mxu0 %v1617
        %1626 = vmatprep.subr.bf16.mxu0 0
        %1627 = vmatpush1.bf16.msra.mxu0 %v1618
        %1628 = vmatprep.subr.bf16.mxu0 0
        %1629 = vmatpush1.bf16.msra.mxu0 0
        %1630 = vmatprep.subr.bf16.mxu0 0
        %1631 = vmatpush1.bf16.msra.mxu0 0
        %1632 = vmatprep.subr.bf16.mxu0 0
        %1633 = vmatpush1.bf16.msra.mxu0 0
        %1634 = vmatprep.subr.bf16.mxu0 0
        %1635 = vmatpush1.bf16.msra.mxu0 0
        %1636 = vmatprep.subr.bf16.mxu0 0
        %1637 = vmatpush1.bf16.msra.mxu0 0
        %1638 = vmatprep.subr.bf16.mxu0 0
        %1639 = vmatpush1.bf16.msra.mxu0 0
        %1640 = vmatprep.subr.bf16.mxu0 0
        %1641 = vmatpush1.bf16.msra.mxu0 0
        %1642 = vmatprep.subr.bf16.mxu0 0
        %1643 = vmatpush1.bf16.msra.mxu0 0
        %1644 = vmatprep.subr.bf16.mxu0 0
        %1645 = vmatpush1.bf16.msra.mxu0 0
        %1646 = vmatprep.subr.bf16.mxu0 0
        %1647 = vmatpush1.bf16.msra.mxu0 0
        %1648 = vmatprep.subr.bf16.mxu0 0
        %1649 = vmatpush1.bf16.msra.mxu0 0
        %1650 = vmatprep.subr.bf16.mxu0 0
        %1651 = vmatpush1.bf16.msra.mxu0 0
        %1652 = vmatprep.subr.bf16.mxu0 0
        %1653 = vmatpush1.bf16.msra.mxu0 0
        %1654 = vmatprep.subr.bf16.mxu0 0
        %1655 = vmatpush1.bf16.msra.mxu0 0
        %1656 = vmatprep.mubr.bf16.mxu0 0
        %1657 = vmatmul.mubr.bf16.gmra.mrb[0].mxu0 %v1622
        %v1658 = vpop.f32.mrb[0].mxu0
        %v1659 = vadd.f32 0.0, %v1658
        %v1660 = vpop.f32.mrb[0].mxu0
        %v1661 = vpop.f32.mrb[0].mxu0
        %v1662 = vadd.f32 0.0, %v1661
        %v1663 = vpop.f32.mrb[0].mxu0
        %1664 = vdwg.mxu0
        %v1665 = vadd.f32 %v1558, %v1659
        %v1666 = vadd.f32 %v1559, %v1662
        %1667 = vrot.lane.b32.xlu0 %v1121, 64
        %v1668 = vpop.permute.xlu0 %1667
        %v1671 = vsel %vm1341, %v1432, 0
        %1673 = vmatprep.subr.bf16.mxu0 0
        %1674 = vmatpush1.bf16.msra.mxu0 %v1668
        %1675 = vmatprep.subr.bf16.mxu0 0
        %1676 = vmatpush1.bf16.msra.mxu0 0
        %1677 = vmatprep.subr.bf16.mxu0 0
        %1678 = vmatpush1.bf16.msra.mxu0 0
        %1679 = vmatprep.subr.bf16.mxu0 0
        %1680 = vmatpush1.bf16.msra.mxu0 0
        %1681 = vmatprep.subr.bf16.mxu0 0
        %1682 = vmatpush1.bf16.msra.mxu0 0
        %1683 = vmatprep.subr.bf16.mxu0 0
        %1684 = vmatpush1.bf16.msra.mxu0 0
        %1685 = vmatprep.subr.bf16.mxu0 0
        %1686 = vmatpush1.bf16.msra.mxu0 0
        %1687 = vmatprep.subr.bf16.mxu0 0
        %1688 = vmatpush1.bf16.msra.mxu0 0
        %1689 = vmatprep.subr.bf16.mxu0 0
        %1690 = vmatpush1.bf16.msra.mxu0 0
        %1691 = vmatprep.subr.bf16.mxu0 0
        %1692 = vmatpush1.bf16.msra.mxu0 0
        %1693 = vmatprep.subr.bf16.mxu0 0
        %1694 = vmatpush1.bf16.msra.mxu0 0
        %1695 = vmatprep.subr.bf16.mxu0 0
        %1696 = vmatpush1.bf16.msra.mxu0 0
        %1697 = vmatprep.subr.bf16.mxu0 0
        %1698 = vmatpush1.bf16.msra.mxu0 0
        %1699 = vmatprep.subr.bf16.mxu0 0
        %1700 = vmatpush1.bf16.msra.mxu0 0
        %1701 = vmatprep.subr.bf16.mxu0 0
        %1702 = vmatpush1.bf16.msra.mxu0 0
        %1703 = vmatprep.subr.bf16.mxu0 0
        %1704 = vmatpush1.bf16.msra.mxu0 0
        %1705 = vmatprep.mubr.bf16.mxu0 0
        %1706 = vmatmul.mubr.bf16.gmra.mrb[0].mxu0 %v1671
        %v1707 = vpop.f32.mrb[0].mxu0
        %v1708 = vadd.f32 0.0, %v1707
        %v1709 = vpop.f32.mrb[0].mxu0
        %v1710 = vpop.f32.mrb[0].mxu0
        %v1711 = vadd.f32 0.0, %v1710
        %v1712 = vpop.f32.mrb[0].mxu0
        %1713 = vdwg.mxu0
        %v1714 = vpack.c.bf16 %v1711, %v1708
        %v1719 = vunpack.c.l.b16 %v1442
        %v1720 = vunpack.c.l.b16 %v1443
        %v1721 = vunpack.c.l.b16 %v1444
        %v1722 = vunpack.c.l.b16 %v1445
        %v1723 = vpack.c.b16 %v1720, %v1719
        %v1724 = vpack.c.b16 %v1722, %v1721
        %v1728 = vsel %vm1122, %v1714, 0
        %1730 = vmatprep.subr.bf16.mxu0 0
        %1731 = vmatpush1.bf16.msra.mxu0 %v1723
        %1732 = vmatprep.subr.bf16.mxu0 0
        %1733 = vmatpush1.bf16.msra.mxu0 %v1724
        %1734 = vmatprep.subr.bf16.mxu0 0
        %1735 = vmatpush1.bf16.msra.mxu0 0
        %1736 = vmatprep.subr.bf16.mxu0 0
        %1737 = vmatpush1.bf16.msra.mxu0 0
        %1738 = vmatprep.subr.bf16.mxu0 0
        %1739 = vmatpush1.bf16.msra.mxu0 0
        %1740 = vmatprep.subr.bf16.mxu0 0
        %1741 = vmatpush1.bf16.msra.mxu0 0
        %1742 = vmatprep.subr.bf16.mxu0 0
        %1743 = vmatpush1.bf16.msra.mxu0 0
        %1744 = vmatprep.subr.bf16.mxu0 0
        %1745 = vmatpush1.bf16.msra.mxu0 0
        %1746 = vmatprep.subr.bf16.mxu0 0
        %1747 = vmatpush1.bf16.msra.mxu0 0
        %1748 = vmatprep.subr.bf16.mxu0 0
        %1749 = vmatpush1.bf16.msra.mxu0 0
        %1750 = vmatprep.subr.bf16.mxu0 0
        %1751 = vmatpush1.bf16.msra.mxu0 0
        %1752 = vmatprep.subr.bf16.mxu0 0
        %1753 = vmatpush1.bf16.msra.mxu0 0
        %1754 = vmatprep.subr.bf16.mxu0 0
        %1755 = vmatpush1.bf16.msra.mxu0 0
        %1756 = vmatprep.subr.bf16.mxu0 0
        %1757 = vmatpush1.bf16.msra.mxu0 0
        %1758 = vmatprep.subr.bf16.mxu0 0
        %1759 = vmatpush1.bf16.msra.mxu0 0
        %1760 = vmatprep.subr.bf16.mxu0 0
        %1761 = vmatpush1.bf16.msra.mxu0 0
        %1762 = vmatprep.mubr.bf16.mxu0 0
        %1763 = vmatmul.mubr.bf16.gmra.mrb[0].mxu0 %v1728
        %v1764 = vpop.f32.mrb[0].mxu0
        %v1765 = vadd.f32 0.0, %v1764
        %v1766 = vpop.f32.mrb[0].mxu0
        %v1767 = vpop.f32.mrb[0].mxu0
        %v1768 = vadd.f32 0.0, %v1767
        %v1769 = vpop.f32.mrb[0].mxu0
        %1770 = vdwg.mxu0
        %v1771 = vadd.f32 %v1665, %v1765
        %v1772 = vadd.f32 %v1666, %v1768
        %1773 = vrot.lane.b32.xlu0 %v1121, 32
        %v1774 = vpop.permute.xlu0 %1773
        %v1777 = vsel %vm1341, %v1433, 0
        %1779 = vmatprep.subr.bf16.mxu0 0
        %1780 = vmatpush1.bf16.msra.mxu0 %v1774
        %1781 = vmatprep.subr.bf16.mxu0 0
        %1782 = vmatpush1.bf16.msra.mxu0 0
        %1783 = vmatprep.subr.bf16.mxu0 0
        %1784 = vmatpush1.bf16.msra.mxu0 0
        %1785 = vmatprep.subr.bf16.mxu0 0
        %1786 = vmatpush1.bf16.msra.mxu0 0
        %1787 = vmatprep.subr.bf16.mxu0 0
        %1788 = vmatpush1.bf16.msra.mxu0 0
        %1789 = vmatprep.subr.bf16.mxu0 0
        %1790 = vmatpush1.bf16.msra.mxu0 0
        %1791 = vmatprep.subr.bf16.mxu0 0
        %1792 = vmatpush1.bf16.msra.mxu0 0
        %1793 = vmatprep.subr.bf16.mxu0 0
        %1794 = vmatpush1.bf16.msra.mxu0 0
        %1795 = vmatprep.subr.bf16.mxu0 0
        %1796 = vmatpush1.bf16.msra.mxu0 0
        %1797 = vmatprep.subr.bf16.mxu0 0
        %1798 = vmatpush1.bf16.msra.mxu0 0
        %1799 = vmatprep.subr.bf16.mxu0 0
        %1800 = vmatpush1.bf16.msra.mxu0 0
        %1801 = vmatprep.subr.bf16.mxu0 0
        %1802 = vmatpush1.bf16.msra.mxu0 0
        %1803 = vmatprep.subr.bf16.mxu0 0
        %1804 = vmatpush1.bf16.msra.mxu0 0
        %1805 = vmatprep.subr.bf16.mxu0 0
        %1806 = vmatpush1.bf16.msra.mxu0 0
        %1807 = vmatprep.subr.bf16.mxu0 0
        %1808 = vmatpush1.bf16.msra.mxu0 0
        %1809 = vmatprep.subr.bf16.mxu0 0
        %1810 = vmatpush1.bf16.msra.mxu0 0
        %1811 = vmatprep.mubr.bf16.mxu0 0
        %1812 = vmatmul.mubr.bf16.gmra.mrb[0].mxu0 %v1777
        %v1813 = vpop.f32.mrb[0].mxu0
        %v1814 = vadd.f32 0.0, %v1813
        %v1815 = vpop.f32.mrb[0].mxu0
        %v1816 = vpop.f32.mrb[0].mxu0
        %v1817 = vadd.f32 0.0, %v1816
        %v1818 = vpop.f32.mrb[0].mxu0
        %1819 = vdwg.mxu0
        %v1820 = vpack.c.bf16 %v1817, %v1814
        %v1825 = vunpack.c.l.b16 %v1446
        %v1826 = vunpack.c.l.b16 %v1447
        %v1827 = vunpack.c.l.b16 %v1448
        %v1828 = vunpack.c.l.b16 %v1449
        %v1829 = vpack.c.b16 %v1826, %v1825
        %v1830 = vpack.c.b16 %v1828, %v1827
        %v1834 = vsel %vm1122, %v1820, 0
        %1836 = vmatprep.subr.bf16.mxu0 0
        %1837 = vmatpush1.bf16.msra.mxu0 %v1829
        %1838 = vmatprep.subr.bf16.mxu0 0
        %1839 = vmatpush1.bf16.msra.mxu0 %v1830
        %1840 = vmatprep.subr.bf16.mxu0 0
        %1841 = vmatpush1.bf16.msra.mxu0 0
        %1842 = vmatprep.subr.bf16.mxu0 0
        %1843 = vmatpush1.bf16.msra.mxu0 0
        %1844 = vmatprep.subr.bf16.mxu0 0
        %1845 = vmatpush1.bf16.msra.mxu0 0
        %1846 = vmatprep.subr.bf16.mxu0 0
        %1847 = vmatpush1.bf16.msra.mxu0 0
        %1848 = vmatprep.subr.bf16.mxu0 0
        %1849 = vmatpush1.bf16.msra.mxu0 0
        %1850 = vmatprep.subr.bf16.mxu0 0
        %1851 = vmatpush1.bf16.msra.mxu0 0
        %1852 = vmatprep.subr.bf16.mxu0 0
        %1853 = vmatpush1.bf16.msra.mxu0 0
        %1854 = vmatprep.subr.bf16.mxu0 0
        %1855 = vmatpush1.bf16.msra.mxu0 0
        %1856 = vmatprep.subr.bf16.mxu0 0
        %1857 = vmatpush1.bf16.msra.mxu0 0
        %1858 = vmatprep.subr.bf16.mxu0 0
        %1859 = vmatpush1.bf16.msra.mxu0 0
        %1860 = vmatprep.subr.bf16.mxu0 0
        %1861 = vmatpush1.bf16.msra.mxu0 0
        %1862 = vmatprep.subr.bf16.mxu0 0
        %1863 = vmatpush1.bf16.msra.mxu0 0
        %1864 = vmatprep.subr.bf16.mxu0 0
        %1865 = vmatpush1.bf16.msra.mxu0 0
        %1866 = vmatprep.subr.bf16.mxu0 0
        %1867 = vmatpush1.bf16.msra.mxu0 0
        %1868 = vmatprep.mubr.bf16.mxu0 0
        %1869 = vmatmul.mubr.bf16.gmra.mrb[0].mxu0 %v1834
        %v1870 = vpop.f32.mrb[0].mxu0
        %v1871 = vadd.f32 0.0, %v1870
        %v1872 = vpop.f32.mrb[0].mxu0
        %v1873 = vpop.f32.mrb[0].mxu0
        %v1874 = vadd.f32 0.0, %v1873
        %v1875 = vpop.f32.mrb[0].mxu0
        %1876 = vdwg.mxu0
        %v1877 = vadd.f32 %v1771, %v1871
        %v1878 = vadd.f32 %v1772, %v1874
        %v1879 = vadd.f32 %v853, %v1877
        %v1880 = vadd.f32 %v854, %v1878
        %v1881 = vld [vmem:[%s785] sm:$0x1]
        %v1882 = vld [vmem:[%s788] sm:$0x1]
        %1883 = vadd.xlane.f32.xlu0 %v1879
        %v1884 = vpop.xlane.xlu0 %1883
        %1885 = vadd.xlane.f32.xlu0 %v1880
        %v1886 = vpop.xlane.xlu0 %1885
        %v1887 = vrcp.pop 128.0
        %v1888 = vmul.f32 %v1884, %v1887
        %v1889 = vmul.f32 %v1886, %v1887
        %v1890 = vsub.f32 %v1879, %v1888
        %v1891 = vsub.f32 %v1880, %v1889
        %v1892 = vmul.f32 %v1890, %v1890
        %v1893 = vmul.f32 %v1891, %v1891
        %1894 = vadd.xlane.f32.xlu0 %v1892
        %v1895 = vpop.xlane.xlu0 %1894
        %1896 = vadd.xlane.f32.xlu0 %v1893
        %v1897 = vpop.xlane.xlu0 %1896
        %v1898 = vmul.f32 %v1895, %v1887
        %v1899 = vmul.f32 %v1897, %v1887
        %v1900 = vadd.f32 %v1898, 1e-12
        %v1901 = vadd.f32 %v1899, 1e-12
        %v1902 = vrsqrt.pop %v1900
        %v1903 = vrsqrt.pop %v1901
        %v1904 = vmul.f32 %v1890, %v1902
        %v1905 = vmul.f32 %v1891, %v1903
        %v1907 = vlaneseq
        %v1908 = vshrl.u32 %v1907, 7
        %v1909 = vsub.s32 0, %v1908
        %v1910 = vrot.slane %v1881, %v1909
        %v1912 = vmul.f32 %v1904, %v1910
        %v1913 = vmul.f32 %v1905, %v1910
        %v1915 = vlaneseq
        %v1916 = vshrl.u32 %v1915, 7
        %v1917 = vsub.s32 0, %v1916
        %v1918 = vrot.slane %v1882, %v1917
        %v1920 = vadd.f32 %v1912, %v1918
        %v1921 = vadd.f32 %v1913, %v1918
        %v1922 = vpack.c.bf16 %v1921, %v1920
        %v1923 = vld [vmem:[%s671] sm:$0xff]
        %v1924 = vld [vmem:[%s671 + $0x8] sm:$0xff]
        %v1925 = vld [vmem:[%s671 + $0x10] sm:$0xff]
        %v1926 = vld [vmem:[%s671 + $0x18] sm:$0xff]
        %v1927 = vld [vmem:[%s671 + $0x20] sm:$0xff]
        %v1928 = vld [vmem:[%s671 + $0x28] sm:$0xff]
        %v1929 = vld [vmem:[%s671 + $0x30] sm:$0xff]
        %v1930 = vld [vmem:[%s671 + $0x38] sm:$0xff]
        %v1931 = vld [vmem:[%s671 + $0x40] sm:$0xff]
        %v1932 = vld [vmem:[%s671 + $0x48] sm:$0xff]
        %v1933 = vld [vmem:[%s671 + $0x50] sm:$0xff]
        %v1934 = vld [vmem:[%s671 + $0x58] sm:$0xff]
        %v1935 = vld [vmem:[%s671 + $0x60] sm:$0xff]
        %v1936 = vld [vmem:[%s671 + $0x68] sm:$0xff]
        %v1937 = vld [vmem:[%s671 + $0x70] sm:$0xff]
        %v1938 = vld [vmem:[%s671 + $0x78] sm:$0xff]
        %v1939 = vld [vmem:[%s792] sm:$0x3]
        %v1941 = vlaneseq
        %v1942 = vshrl.u32 %v1941, 7
        %v1943 = vsub.s32 0, %v1942
        %v1944 = vrot.slane %v1939, %v1943
        %v1945 = vlaneseq
        %v1946 = vshrl.u32 %v1945, 7
        %v1947 = vsub.s32 1, %v1946
        %v1948 = vrot.slane %v1939, %v1947
        %v1967 = vunpack.c.l.b16 %v1923
        %v1968 = vunpack.c.h.b16 %v1923
        %v1969 = vunpack.c.l.b16 %v1924
        %v1970 = vunpack.c.h.b16 %v1924
        %v1971 = vunpack.c.l.b16 %v1925
        %v1972 = vunpack.c.h.b16 %v1925
        %v1973 = vunpack.c.l.b16 %v1926
        %v1974 = vunpack.c.h.b16 %v1926
        %v1975 = vunpack.c.l.b16 %v1927
        %v1976 = vunpack.c.h.b16 %v1927
        %v1977 = vunpack.c.l.b16 %v1928
        %v1978 = vunpack.c.h.b16 %v1928
        %v1979 = vunpack.c.l.b16 %v1929
        %v1980 = vunpack.c.h.b16 %v1929
        %v1981 = vunpack.c.l.b16 %v1930
        %v1982 = vunpack.c.h.b16 %v1930
        %v1983 = vunpack.c.l.b16 %v1931
        %v1984 = vunpack.c.h.b16 %v1931
        %v1985 = vunpack.c.l.b16 %v1932
        %v1986 = vunpack.c.h.b16 %v1932
        %v1987 = vunpack.c.l.b16 %v1933
        %v1988 = vunpack.c.h.b16 %v1933
        %v1989 = vunpack.c.l.b16 %v1934
        %v1990 = vunpack.c.h.b16 %v1934
        %v1991 = vunpack.c.l.b16 %v1935
        %v1992 = vunpack.c.h.b16 %v1935
        %v1993 = vunpack.c.l.b16 %v1936
        %v1994 = vunpack.c.h.b16 %v1936
        %v1995 = vunpack.c.l.b16 %v1937
        %v1996 = vunpack.c.h.b16 %v1937
        %v1997 = vunpack.c.l.b16 %v1938
        %v1998 = vunpack.c.h.b16 %v1938
        %v1999 = vpack.c.b16 %v1969, %v1967
        %v2000 = vpack.c.b16 %v1970, %v1968
        %v2001 = vpack.c.b16 %v1973, %v1971
        %v2002 = vpack.c.b16 %v1974, %v1972
        %v2003 = vpack.c.b16 %v1977, %v1975
        %v2004 = vpack.c.b16 %v1978, %v1976
        %v2005 = vpack.c.b16 %v1981, %v1979
        %v2006 = vpack.c.b16 %v1982, %v1980
        %v2007 = vpack.c.b16 %v1985, %v1983
        %v2008 = vpack.c.b16 %v1986, %v1984
        %v2009 = vpack.c.b16 %v1989, %v1987
        %v2010 = vpack.c.b16 %v1990, %v1988
        %v2011 = vpack.c.b16 %v1993, %v1991
        %v2012 = vpack.c.b16 %v1994, %v1992
        %v2013 = vpack.c.b16 %v1997, %v1995
        %v2014 = vpack.c.b16 %v1998, %v1996
        %2031 = vmatprep.subr.bf16.mxu0 %v2000
        %2032 = vmatpush1.bf16.msra.mxu0 %v1999
        %2033 = vmatprep.subr.bf16.mxu0 %v2002
        %2034 = vmatpush1.bf16.msra.mxu0 %v2001
        %2035 = vmatprep.subr.bf16.mxu0 %v2004
        %2036 = vmatpush1.bf16.msra.mxu0 %v2003
        %2037 = vmatprep.subr.bf16.mxu0 %v2006
        %2038 = vmatpush1.bf16.msra.mxu0 %v2005
        %2039 = vmatprep.subr.bf16.mxu0 %v2008
        %2040 = vmatpush1.bf16.msra.mxu0 %v2007
        %2041 = vmatprep.subr.bf16.mxu0 %v2010
        %2042 = vmatpush1.bf16.msra.mxu0 %v2009
        %2043 = vmatprep.subr.bf16.mxu0 %v2012
        %2044 = vmatpush1.bf16.msra.mxu0 %v2011
        %2045 = vmatprep.subr.bf16.mxu0 %v2014
        %2046 = vmatpush1.bf16.msra.mxu0 %v2013
        %2047 = vmatprep.subr.bf16.mxu0 0
        %2048 = vmatpush1.bf16.msra.mxu0 0
        %2049 = vmatprep.subr.bf16.mxu0 0
        %2050 = vmatpush1.bf16.msra.mxu0 0
        %2051 = vmatprep.subr.bf16.mxu0 0
        %2052 = vmatpush1.bf16.msra.mxu0 0
        %2053 = vmatprep.subr.bf16.mxu0 0
        %2054 = vmatpush1.bf16.msra.mxu0 0
        %2055 = vmatprep.subr.bf16.mxu0 0
        %2056 = vmatpush1.bf16.msra.mxu0 0
        %2057 = vmatprep.subr.bf16.mxu0 0
        %2058 = vmatpush1.bf16.msra.mxu0 0
        %2059 = vmatprep.subr.bf16.mxu0 0
        %2060 = vmatpush1.bf16.msra.mxu0 0
        %2061 = vmatprep.subr.bf16.mxu0 0
        %2062 = vmatpush1.bf16.msra.mxu0 0
        %2063 = vmatprep.mubr.bf16.mxu0 0
        %2064 = vmatmul.mubr.bf16.gmra.mrb[0].mxu0 %v1922
        %v2065 = vpop.f32.mrb[0].mxu0
        %v2066 = vadd.f32 %v1944, %v2065
        %v2067 = vpop.f32.mrb[0].mxu0
        %v2068 = vadd.f32 %v1948, %v2067
        %v2069 = vpop.f32.mrb[0].mxu0
        %v2070 = vadd.f32 %v1944, %v2069
        %v2071 = vpop.f32.mrb[0].mxu0
        %v2072 = vadd.f32 %v1948, %v2071
        %2073 = vdwg.mxu0
        %v2074 = vmul.f32 %v2066, %v2066
        %v2075 = vmul.f32 %v2068, %v2068
        %v2076 = vmul.f32 %v2070, %v2070
        %v2077 = vmul.f32 %v2072, %v2072
        %v2078 = vmul.f32 %v2066, %v2074
        %v2079 = vmul.f32 %v2068, %v2075
        %v2080 = vmul.f32 %v2070, %v2076
        %v2081 = vmul.f32 %v2072, %v2077
        %v2082 = vmul.f32 %v2078, 0.044715
        %v2083 = vmul.f32 %v2079, 0.044715
        %v2084 = vmul.f32 %v2080, 0.044715
        %v2085 = vmul.f32 %v2081, 0.044715
        %v2086 = vadd.f32 %v2066, %v2082
        %v2087 = vadd.f32 %v2068, %v2083
        %v2088 = vadd.f32 %v2070, %v2084
        %v2089 = vadd.f32 %v2072, %v2085
        %v2090 = vmul.f32 %v2086, 0.7978846
        %v2091 = vmul.f32 %v2087, 0.7978846
        %v2092 = vmul.f32 %v2088, 0.7978846
        %v2093 = vmul.f32 %v2089, 0.7978846
        %v2094 = vtanh.pop %v2090
        %v2095 = vtanh.pop %v2091
        %v2096 = vtanh.pop %v2092
        %v2097 = vtanh.pop %v2093
        %v2098 = vadd.f32 %v2094, 1.0
        %v2099 = vadd.f32 %v2095, 1.0
        %v2100 = vadd.f32 %v2096, 1.0
        %v2101 = vadd.f32 %v2097, 1.0
        %v2102 = vmul.f32 %v2098, 0.5
        %v2103 = vmul.f32 %v2099, 0.5
        %v2104 = vmul.f32 %v2100, 0.5
        %v2105 = vmul.f32 %v2101, 0.5
        %v2106 = vmul.f32 %v2066, %v2102
        %v2107 = vmul.f32 %v2068, %v2103
        %v2108 = vmul.f32 %v2070, %v2104
        %v2109 = vmul.f32 %v2072, %v2105
        %v2110 = vpack.c.bf16 %v2108, %v2106
        %v2111 = vpack.c.bf16 %v2109, %v2107
        %v2112 = vld [vmem:[%s680] sm:$0xf]
        %v2113 = vld [vmem:[%s680 + $0x4] sm:$0xf]
        %v2114 = vld [vmem:[%s680 + $0x8] sm:$0xf]
        %v2115 = vld [vmem:[%s680 + $0xc] sm:$0xf]
        %v2116 = vld [vmem:[%s680 + $0x10] sm:$0xf]
        %v2117 = vld [vmem:[%s680 + $0x14] sm:$0xf]
        %v2118 = vld [vmem:[%s680 + $0x18] sm:$0xf]
        %v2119 = vld [vmem:[%s680 + $0x1c] sm:$0xf]
        %v2120 = vld [vmem:[%s680 + $0x20] sm:$0xf]
        %v2121 = vld [vmem:[%s680 + $0x24] sm:$0xf]
        %v2122 = vld [vmem:[%s680 + $0x28] sm:$0xf]
        %v2123 = vld [vmem:[%s680 + $0x2c] sm:$0xf]
        %v2124 = vld [vmem:[%s680 + $0x30] sm:$0xf]
        %v2125 = vld [vmem:[%s680 + $0x34] sm:$0xf]
        %v2126 = vld [vmem:[%s680 + $0x38] sm:$0xf]
        %v2127 = vld [vmem:[%s680 + $0x3c] sm:$0xf]
        %v2128 = vld [vmem:[%s680 + $0x40] sm:$0xf]
        %v2129 = vld [vmem:[%s680 + $0x44] sm:$0xf]
        %v2130 = vld [vmem:[%s680 + $0x48] sm:$0xf]
        %v2131 = vld [vmem:[%s680 + $0x4c] sm:$0xf]
        %v2132 = vld [vmem:[%s680 + $0x50] sm:$0xf]
        %v2133 = vld [vmem:[%s680 + $0x54] sm:$0xf]
        %v2134 = vld [vmem:[%s680 + $0x58] sm:$0xf]
        %v2135 = vld [vmem:[%s680 + $0x5c] sm:$0xf]
        %v2136 = vld [vmem:[%s680 + $0x60] sm:$0xf]
        %v2137 = vld [vmem:[%s680 + $0x64] sm:$0xf]
        %v2138 = vld [vmem:[%s680 + $0x68] sm:$0xf]
        %v2139 = vld [vmem:[%s680 + $0x6c] sm:$0xf]
        %v2140 = vld [vmem:[%s680 + $0x70] sm:$0xf]
        %v2141 = vld [vmem:[%s680 + $0x74] sm:$0xf]
        %v2142 = vld [vmem:[%s680 + $0x78] sm:$0xf]
        %v2143 = vld [vmem:[%s680 + $0x7c] sm:$0xf]
        %v2144 = vld [vmem:[%s795] sm:$0x1]
        %v2146 = vlaneseq
        %v2147 = vshrl.u32 %v2146, 7
        %v2148 = vsub.s32 0, %v2147
        %v2149 = vrot.slane %v2144, %v2148
        %v2183 = vunpack.c.l.b16 %v2112
        %v2184 = vunpack.c.l.b16 %v2113
        %v2185 = vunpack.c.l.b16 %v2114
        %v2186 = vunpack.c.l.b16 %v2115
        %v2187 = vunpack.c.l.b16 %v2116
        %v2188 = vunpack.c.l.b16 %v2117
        %v2189 = vunpack.c.l.b16 %v2118
        %v2190 = vunpack.c.l.b16 %v2119
        %v2191 = vunpack.c.l.b16 %v2120
        %v2192 = vunpack.c.l.b16 %v2121
        %v2193 = vunpack.c.l.b16 %v2122
        %v2194 = vunpack.c.l.b16 %v2123
        %v2195 = vunpack.c.l.b16 %v2124
        %v2196 = vunpack.c.l.b16 %v2125
        %v2197 = vunpack.c.l.b16 %v2126
        %v2198 = vunpack.c.l.b16 %v2127
        %v2199 = vunpack.c.l.b16 %v2128
        %v2200 = vunpack.c.l.b16 %v2129
        %v2201 = vunpack.c.l.b16 %v2130
        %v2202 = vunpack.c.l.b16 %v2131
        %v2203 = vunpack.c.l.b16 %v2132
        %v2204 = vunpack.c.l.b16 %v2133
        %v2205 = vunpack.c.l.b16 %v2134
        %v2206 = vunpack.c.l.b16 %v2135
        %v2207 = vunpack.c.l.b16 %v2136
        %v2208 = vunpack.c.l.b16 %v2137
        %v2209 = vunpack.c.l.b16 %v2138
        %v2210 = vunpack.c.l.b16 %v2139
        %v2211 = vunpack.c.l.b16 %v2140
        %v2212 = vunpack.c.l.b16 %v2141
        %v2213 = vunpack.c.l.b16 %v2142
        %v2214 = vunpack.c.l.b16 %v2143
        %v2215 = vpack.c.b16 %v2184, %v2183
        %v2216 = vpack.c.b16 %v2186, %v2185
        %v2217 = vpack.c.b16 %v2188, %v2187
        %v2218 = vpack.c.b16 %v2190, %v2189
        %v2219 = vpack.c.b16 %v2192, %v2191
        %v2220 = vpack.c.b16 %v2194, %v2193
        %v2221 = vpack.c.b16 %v2196, %v2195
        %v2222 = vpack.c.b16 %v2198, %v2197
        %v2223 = vpack.c.b16 %v2200, %v2199
        %v2224 = vpack.c.b16 %v2202, %v2201
        %v2225 = vpack.c.b16 %v2204, %v2203
        %v2226 = vpack.c.b16 %v2206, %v2205
        %v2227 = vpack.c.b16 %v2208, %v2207
        %v2228 = vpack.c.b16 %v2210, %v2209
        %v2229 = vpack.c.b16 %v2212, %v2211
        %v2230 = vpack.c.b16 %v2214, %v2213
        %2247 = vmatprep.subr.bf16.mxu0 0
        %2248 = vmatpush1.bf16.msra.mxu0 %v2215
        %2249 = vmatprep.subr.bf16.mxu0 0
        %2250 = vmatpush1.bf16.msra.mxu0 %v2216
        %2251 = vmatprep.subr.bf16.mxu0 0
        %2252 = vmatpush1.bf16.msra.mxu0 %v2217
        %2253 = vmatprep.subr.bf16.mxu0 0
        %2254 = vmatpush1.bf16.msra.mxu0 %v2218
        %2255 = vmatprep.subr.bf16.mxu0 0
        %2256 = vmatpush1.bf16.msra.mxu0 %v2219
        %2257 = vmatprep.subr.bf16.mxu0 0
        %2258 = vmatpush1.bf16.msra.mxu0 %v2220
        %2259 = vmatprep.subr.bf16.mxu0 0
        %2260 = vmatpush1.bf16.msra.mxu0 %v2221
        %2261 = vmatprep.subr.bf16.mxu0 0
        %2262 = vmatpush1.bf16.msra.mxu0 %v2222
        %2263 = vmatprep.subr.bf16.mxu0 0
        %2264 = vmatpush1.bf16.msra.mxu0 %v2223
        %2265 = vmatprep.subr.bf16.mxu0 0
        %2266 = vmatpush1.bf16.msra.mxu0 %v2224
        %2267 = vmatprep.subr.bf16.mxu0 0
        %2268 = vmatpush1.bf16.msra.mxu0 %v2225
        %2269 = vmatprep.subr.bf16.mxu0 0
        %2270 = vmatpush1.bf16.msra.mxu0 %v2226
        %2271 = vmatprep.subr.bf16.mxu0 0
        %2272 = vmatpush1.bf16.msra.mxu0 %v2227
        %2273 = vmatprep.subr.bf16.mxu0 0
        %2274 = vmatpush1.bf16.msra.mxu0 %v2228
        %2275 = vmatprep.subr.bf16.mxu0 0
        %2276 = vmatpush1.bf16.msra.mxu0 %v2229
        %2277 = vmatprep.subr.bf16.mxu0 0
        %2278 = vmatpush1.bf16.msra.mxu0 %v2230
        %2279 = vmatprep.mubr.bf16.mxu0 %v2111
        %2280 = vmatmul.mubr.bf16.gmra.mrb[0].mxu0 %v2110
        %v2281 = vpop.f32.mrb[0].mxu0
        %v2282 = vadd.f32 %v2149, %v2281
        %v2283 = vpop.f32.mrb[0].mxu0
        %v2284 = vpop.f32.mrb[0].mxu0
        %v2285 = vadd.f32 %v2149, %v2284
        %v2286 = vpop.f32.mrb[0].mxu0
        %2287 = vdwg.mxu0
        %v2288 = vadd.f32 %v1920, %v2282
        %v2289 = vadd.f32 %v1921, %v2285
        %v2290 = vld [vmem:[%s798] sm:$0x1]
        %v2291 = vld [vmem:[%s801] sm:$0x1]
        %2292 = vadd.xlane.f32.xlu0 %v2288
        %v2293 = vpop.xlane.xlu0 %2292
        %2294 = vadd.xlane.f32.xlu0 %v2289
        %v2295 = vpop.xlane.xlu0 %2294
        %v2296 = vmul.f32 %v2293, %v1887
        %v2297 = vmul.f32 %v2295, %v1887
        %v2298 = vsub.f32 %v2288, %v2296
        %v2299 = vsub.f32 %v2289, %v2297
        %v2300 = vmul.f32 %v2298, %v2298
        %v2301 = vmul.f32 %v2299, %v2299
        %2302 = vadd.xlane.f32.xlu0 %v2300
        %v2303 = vpop.xlane.xlu0 %2302
        %2304 = vadd.xlane.f32.xlu0 %v2301
        %v2305 = vpop.xlane.xlu0 %2304
        %v2306 = vmul.f32 %v2303, %v1887
        %v2307 = vmul.f32 %v2305, %v1887
        %v2308 = vadd.f32 %v2306, 1e-12
        %v2309 = vadd.f32 %v2307, 1e-12
        %v2310 = vrsqrt.pop %v2308
        %v2311 = vrsqrt.pop %v2309
        %v2312 = vmul.f32 %v2298, %v2310
        %v2313 = vmul.f32 %v2299, %v2311
        %v2315 = vlaneseq
        %v2316 = vshrl.u32 %v2315, 7
        %v2317 = vsub.s32 0, %v2316
        %v2318 = vrot.slane %v2290, %v2317
        %v2320 = vmul.f32 %v2312, %v2318
        %v2321 = vmul.f32 %v2313, %v2318
        %v2323 = vlaneseq
        %v2324 = vshrl.u32 %v2323, 7
        %v2325 = vsub.s32 0, %v2324
        %v2326 = vrot.slane %v2291, %v2325
        %v2328 = vadd.f32 %v2320, %v2326
        %v2329 = vadd.f32 %v2321, %v2326
        %2330 = vst [vmem:[#allocation2] sm:$0xff] %v2328
        %2331 = vst [vmem:[#allocation2 + $0x8] sm:$0xff] %v2329
        %p2332 = scmp.eq.s32.totalorder %s42, 1
        // Predicated region
        $region105: #{tpu_custom_call.1} parent=83 // pred_check
          %p2333 = pneg %p2332
        $region106: #{tpu_custom_call.1} parent=83 // pred_check_branch
          %2335 = sbr.rel (%p2333) target = $region108
        $region107: #{tpu_custom_call.1} parent=83 // pred_region
          %2336 = vst [vmem:[#allocation11] sm:$0xff] %v2328
          %2337 = vst [vmem:[#allocation11 + $0x8] sm:$0xff] %v2329
        $region108: #{tpu_custom_call.1} parent=83 // pred_fallthru
          _
        // Predicated region
        $region109: #{tpu_custom_call.1} parent=83 // pred_check
          %p2338 = pneg %p468
        $region110: #{tpu_custom_call.1} parent=83 // pred_check_branch
          %2340 = sbr.rel (%p2338) target = $region112
        $region111: #{tpu_custom_call.1} parent=83 // pred_region
          %s2341 = smul.u32 2, %s41
          %s2343 = ssub.s32 256, 256
          %2344 = vsyncadd [#allocation5], %s2343
          %s2345 = smul.addr %s2341, 128
          %s2346 = scalar_lea.hbm %s16, %s2345
          %s2347 = sshll.u32 [#allocation11], 4
          %s2348 = int_to_ptr.vmem [resolvable:$true] %s2347
          %2353 = dma.vmem_to_hbm [thread:$0]  %s2348, 256, %s2346, [#allocation5], 128, 128, 8
        $region112: #{tpu_custom_call.1} parent=83 // pred_fallthru
          _
        // Predicated region
        $region113: #{tpu_custom_call.1} parent=83 // pred_check
          %p2354 = pneg %p468
        $region114: #{tpu_custom_call.1} parent=83 // pred_check_branch
          %2356 = sbr.rel (%p2354) target = $region116
        $region115: #{tpu_custom_call.1} parent=83 // pred_region
          %2357 = dma.done [#allocation5], 256
        $region116: #{tpu_custom_call.1} parent=83 // pred_fallthru
          _
      $region84: #{tpu_custom_call.1} parent=5 // pred_fallthru
        _
      %p2358 = scmp.le.s32.totalorder 2, %s32
      // Predicated region
      $region117: #{tpu_custom_call.1} parent=5 // pred_check
        %p2359 = pneg %p2358
      $region118: #{tpu_custom_call.1} parent=5 // pred_check_branch
        %2361 = sbr.rel (%p2359) target = $region120
      $region119: #{tpu_custom_call.1} parent=5 // pred_region
        %s2362 = ssub.s32 %s32, 2
      $region120: #{tpu_custom_call.1} parent=5 // pred_fallthru
        _
    $region6: #{tpu_custom_call.1} parent=1 // loop_footer
      %s36 = sadd.s32 1, %s32
    $region7: #{tpu_custom_call.1} parent=1 // loop_footer_branch
      %31 = sbr.rel target = $region3
    $region8: #{tpu_custom_call.1} parent=1 // loop_exit
      _
    %2363 = vsyncpa [#allocation4], 1
    %s2364 = scalar_lea.sflag [#allocation4], 1
    %2365 = vsyncpa %s2364, 1
    %2366 = vsyncpa [#allocation7], 1
    %s2367 = scalar_lea.sflag [#allocation7], 1
    %2368 = vsyncpa %s2367, 1
    %2369 = vsyncpa [#allocation10], 1
    %s2370 = scalar_lea.sflag [#allocation10], 1
    %2371 = vsyncpa %s2370, 1
    %2372 = vsyncpa [#allocation5], 1
    %s2373 = scalar_lea.sflag [#allocation5], 1
    %2374 = vsyncpa %s2373, 1

</llo_original>
